<compile_context>
chip_gen: v7x
topology: tpu7x:2x2x1
jax: 0.10.0
libtpu: 0.0.40
codegen_flags: <defaults>
</compile_context>

<pallas_src>
import functools
import math

import jax
import jax.numpy as jnp
from jax.experimental import pallas as pl
from jax.experimental.pallas import tpu as pltpu

LN_EPS = 1e-5            # PyTorch nn.LayerNorm default eps
MASK_FILL = -1e9         # matches masked_fill(mask == 0, -1e9)
_VMEM_LIMIT = 48 * 1024 * 1024   # above the 16/32 MiB defaults, < v7x physical
_MM_DTYPE = jnp.bfloat16         # MXU operand dtype (f32 accumulation)


def _layer_norm(x, gamma, beta):
    """x: (S, D) f32, gamma/beta: (1, D) f32."""
    mu = jnp.mean(x, axis=-1, keepdims=True)
    var = jnp.mean(jnp.square(x - mu), axis=-1, keepdims=True)
    inv = jax.lax.rsqrt(var + LN_EPS)
    return (x - mu) * inv * gamma + beta


# ----------------------------------------------------------------------------
# Kernel 1: LayerNorm1 + MultiHeadAttention + residual, one batch per grid step
# ----------------------------------------------------------------------------
def _attn_block_kernel(lens_ref,                      # scalar-prefetch (SMEM)
                       x_ref, g1_ref, bt1_ref,
                       wqkv_ref, bqkv_ref, wo_ref, bo_ref,
                       y_ref, w_ref,
                       *, heads, d_k, d_kp):
    b = pl.program_id(0)
    length = lens_ref[b]                              # int32 valid key count
    S = x_ref.shape[1]
    D = heads * d_k

    x = x_ref[0].astype(jnp.float32)                  # (S, D)
    x2 = _layer_norm(x, g1_ref[...], bt1_ref[...])

    # Fused head-major QKV projection.  Column layout of wqkv:
    #   [Q head0 | .. | Q headH-1 | K head0 | .. | V headH-1], each head slot
    # padded to d_kp (a 128 multiple) lanes -> every per-head slice below is
    # lane-aligned.  bf16 operands, f32 accumulation.
    qkv = jnp.dot(x2.astype(_MM_DTYPE), wqkv_ref[...],
                  preferred_element_type=jnp.float32) + bqkv_ref[...]  # (S, 3*H*d_kp)

    # Key-padding mask from prefetched lengths: one (1, S) row, broadcast over
    # query rows inside jnp.where (no (S,S) iota/compare work).
    key_valid = jax.lax.broadcasted_iota(jnp.int32, (1, S), 1) < length

    scale = 1.0 / math.sqrt(d_k)
    dn = (((1,), (1,)), ((), ()))                     # contract last axes, no k.T
    attn_acc = jnp.zeros((S, D), jnp.float32)

    for h in range(heads):                            # static unroll, H small
        q_h = qkv[:, h * d_kp:(h + 1) * d_kp].astype(_MM_DTYPE)
        k_h = qkv[:, (heads + h) * d_kp:(heads + h + 1) * d_kp].astype(_MM_DTYPE)
        v_h = qkv[:, (2 * heads + h) * d_kp:(2 * heads + h + 1) * d_kp].astype(_MM_DTYPE)

        # Scores with S on the 128-lane axis; padded q/k columns are zero, so
        # the contraction over d_kp equals the exact d_k contraction.
        s_h = jax.lax.dot_general(q_h, k_h, dn,
                                  preferred_element_type=jnp.float32) * scale
        s_h = jnp.where(key_valid, s_h, MASK_FILL)

        m = jnp.max(s_h, axis=-1, keepdims=True)
        e = jnp.exp(s_h - m)
        denom = jnp.sum(e, axis=-1, keepdims=True)
        p_h = e * pl.reciprocal(denom, approx=True)   # softmax (EUP reciprocal)

        # Per-head write of the attention weights (pre-dropout, eval
        # semantics) -- no (H,S,S) stack, only one (S,S) tile live.
        w_ref[0, h] = p_h.astype(w_ref.dtype)

        o_h = jnp.dot(p_h.astype(_MM_DTYPE), v_h,
                      preferred_element_type=jnp.float32)        # (S, d_kp)
        # Per-head output-projection accumulation; wo rows for this head are
        # padded with zeros to d_kp, matching o_h's zero padded columns.
        attn_acc = attn_acc + jnp.dot(
            o_h.astype(_MM_DTYPE), wo_ref[h * d_kp:(h + 1) * d_kp, :],
            preferred_element_type=jnp.float32)

    # Output projection bias + residual (x = original, pre-norm input).
    y_ref[0] = (x + attn_acc + bo_ref[...]).astype(y_ref.dtype)


def attention_block(x, lengths, p):
    """x: (B, S, D); lengths: (B,) int32 valid key counts."""
    B, S, D = x.shape
    H = p["heads"]
    d_k = p["d_k"]
    d_kp = p["d_kp"]
    HP = H * d_kp

    kernel = functools.partial(_attn_block_kernel, heads=H, d_k=d_k, d_kp=d_kp)

    const = dict(pipeline_mode=pl.Buffered(1))        # loop-invariant operands
    y, attn_w = pl.pallas_call(
        kernel,
        out_shape=(
            jax.ShapeDtypeStruct((B, S, D), x.dtype),
            jax.ShapeDtypeStruct((B, H, S, S), jnp.float32),
        ),
        grid_spec=pltpu.PrefetchScalarGridSpec(
            num_scalar_prefetch=1,                    # lengths -> SMEM
            grid=(B,),
            in_specs=[
                pl.BlockSpec((1, S, D), lambda b, lens: (b, 0, 0)),            # x
                pl.BlockSpec((1, D), lambda b, lens: (0, 0), **const),         # gamma1
                pl.BlockSpec((1, D), lambda b, lens: (0, 0), **const),         # beta1
                pl.BlockSpec((D, 3 * HP), lambda b, lens: (0, 0), **const),    # Wqkv packed
                pl.BlockSpec((1, 3 * HP), lambda b, lens: (0, 0), **const),    # bqkv packed
                pl.BlockSpec((HP, D), lambda b, lens: (0, 0), **const),        # Wo packed
                pl.BlockSpec((1, D), lambda b, lens: (0, 0), **const),         # bo
            ],
            out_specs=(
                pl.BlockSpec((1, S, D), lambda b, lens: (b, 0, 0)),
                pl.BlockSpec((1, H, S, S), lambda b, lens: (b, 0, 0, 0)),
            ),
        ),
        compiler_params=pltpu.CompilerParams(
            dimension_semantics=("parallel",),
            vmem_limit_bytes=_VMEM_LIMIT),
    )(lengths, x, p["g1"], p["bt1"], p["wqkv_t"], p["bqkv"], p["wo_pad_t"], p["bo"])
    return y, attn_w


# ----------------------------------------------------------------------------
# Kernel 2: LayerNorm2 + FeedForward + residual, grid over (B, S tiles)
# ----------------------------------------------------------------------------
def _ffn_block_kernel(y_ref, g2_ref, bt2_ref, w1_ref, b1_ref, w2_ref, b2_ref,
                      o_ref):
    y = y_ref[0].astype(jnp.float32)                  # (Ts, D)
    x2 = _layer_norm(y, g2_ref[...], bt2_ref[...])
    h = jnp.dot(x2.astype(_MM_DTYPE), w1_ref[...],
                preferred_element_type=jnp.float32) + b1_ref[...]
    h = jnp.maximum(h, 0.0)                           # ReLU (FF dropout = identity)
    f = jnp.dot(h.astype(_MM_DTYPE), w2_ref[...],
                preferred_element_type=jnp.float32) + b2_ref[...]
    o_ref[0] = (y + f).astype(o_ref.dtype)            # residual


def _pick_seq_tile(S):
    """Largest tile <= 512 that divides S and is a multiple of 8, else full S.

    Bigger tiles amortize the ~0.35 us per-grid-step overhead; 512 rows keeps
    the (ts, d_ff) f32 intermediate within budget even at d_ff=2048.
    """
    for ts in (512, 256, 128, 64, 32, 16, 8):
        if ts <= S and S % ts == 0:
            return ts
    return S


def ffn_block(y, p, *, ts=None):
    B, S, D = y.shape
    d_ff = p["w1_t"].shape[1]
    if ts is None or ts > S or S % ts != 0 or (ts != S and ts % 8 != 0):
        ts = _pick_seq_tile(S)
    grid = (B, S // ts)

    const = dict(pipeline_mode=pl.Buffered(1))        # loop-invariant operands
    return pl.pallas_call(
        _ffn_block_kernel,
        out_shape=jax.ShapeDtypeStruct((B, S, D), y.dtype),
        grid_spec=pltpu.PrefetchScalarGridSpec(
            num_scalar_prefetch=0,
            grid=grid,
            in_specs=[
                pl.BlockSpec((1, ts, D), lambda b, s: (b, s, 0)),              # y
                pl.BlockSpec((1, D), lambda b, s: (0, 0), **const),            # gamma2
                pl.BlockSpec((1, D), lambda b, s: (0, 0), **const),            # beta2
                pl.BlockSpec((D, d_ff), lambda b, s: (0, 0), **const),         # W1^T
                pl.BlockSpec((1, d_ff), lambda b, s: (0, 0), **const),         # b1
                pl.BlockSpec((d_ff, D), lambda b, s: (0, 0), **const),         # W2^T
                pl.BlockSpec((1, D), lambda b, s: (0, 0), **const),            # b2
            ],
            out_specs=pl.BlockSpec((1, ts, D), lambda b, s: (b, s, 0)),
        ),
        compiler_params=pltpu.CompilerParams(
            dimension_semantics=("parallel", "parallel"),
            vmem_limit_bytes=_VMEM_LIMIT),
    )(y, p["g2"], p["bt2"], p["w1_t"], p["b1"], p["w2_t"], p["b2"])


# ----------------------------------------------------------------------------
# Parameter prep (done ONCE, outside the kernels / per-call path)
# ----------------------------------------------------------------------------
def prepare_encoder_params(raw, heads):
    """Pre-transpose, head-major pack and lane-pad the weights (one time)."""
    D = raw["Wq"].shape[0]
    d_k = D // heads
    d_kp = ((d_k + 127) // 128) * 128                 # 128-lane aligned head slot

    def pack_head_major(w, b):
        # w: (D_out, D_in) PyTorch Linear weight; use W^T with columns grouped
        # per head and each head's d_k columns zero-padded to d_kp lanes.
        w3 = w.T.reshape(D, heads, d_k)
        w3 = jnp.pad(w3, ((0, 0), (0, 0), (0, d_kp - d_k)))
        b3 = jnp.pad(b.reshape(heads, d_k), ((0, 0), (0, d_kp - d_k)))
        return w3.reshape(D, heads * d_kp), b3.reshape(1, heads * d_kp)

    wq_p, bq_p = pack_head_major(raw["Wq"], raw["bq"])
    wk_p, bk_p = pack_head_major(raw["Wk"], raw["bk"])
    wv_p, bv_p = pack_head_major(raw["Wv"], raw["bv"])
    wqkv_t = jnp.concatenate([wq_p, wk_p, wv_p], axis=1).astype(_MM_DTYPE)
    bqkv = jnp.concatenate([bq_p, bk_p, bv_p], axis=1).astype(jnp.float32)

    # Wo^T rows grouped per head, each head's d_k rows zero-padded to d_kp.
    wo3 = raw["Wo"].T.reshape(heads, d_k, D)
    wo_pad_t = jnp.pad(wo3, ((0, 0), (0, d_kp - d_k), (0, 0)))
    wo_pad_t = wo_pad_t.reshape(heads * d_kp, D).astype(_MM_DTYPE)

    return dict(
        heads=heads, d_k=d_k, d_kp=d_kp,
        g1=raw["g1"].reshape(1, D), bt1=raw["bt1"].reshape(1, D),
        g2=raw["g2"].reshape(1, D), bt2=raw["bt2"].reshape(1, D),
        wqkv_t=wqkv_t, bqkv=bqkv,
        wo_pad_t=wo_pad_t, bo=raw["bo"].reshape(1, D),
        w1_t=raw["W1"].T.astype(_MM_DTYPE), b1=raw["b1"].reshape(1, -1),
        w2_t=raw["W2"].T.astype(_MM_DTYPE), b2=raw["b2"].reshape(1, D),
    )


def encoder_layer_forward(x, lengths, prepped):
    """EncoderLayer.forward: returns (x_out, attention_weight)."""
    y, attn_w = attention_block(x, lengths, prepped)
    out = ffn_block(y, prepped)
    return out, attn_w


# ----------------------------------------------------------------------------
# Pure-JAX f32 reference mirroring the PyTorch forward (dropout = identity)
# ----------------------------------------------------------------------------
def reference_encoder_layer(x, mask, raw, heads):
    B, S, D = x.shape
    d_k = D // heads

    def ln(v, g, b):
        mu = v.mean(-1, keepdims=True)
        var = ((v - mu) ** 2).mean(-1, keepdims=True)
        return (v - mu) / jnp.sqrt(var + LN_EPS) * g + b

    def lin(v, w, b):
        return v @ w.T + b

    x2 = ln(x, raw["g1"], raw["bt1"])
    q = lin(x2, raw["Wq"], raw["bq"]).reshape(B, S, heads, d_k).transpose(0, 2, 1, 3)
    k = lin(x2, raw["Wk"], raw["bk"]).reshape(B, S, heads, d_k).transpose(0, 2, 1, 3)
    v = lin(x2, raw["Wv"], raw["bv"]).reshape(B, S, heads, d_k).transpose(0, 2, 1, 3)

    scores = jnp.einsum("bhqd,bhkd->bhqk", q, k) / math.sqrt(d_k)
    scores = jnp.where(mask[:, None, :, :] == 0, MASK_FILL, scores)
    probs = jax.nn.softmax(scores, axis=-1)
    o = jnp.einsum("bhqk,bhkd->bhqd", probs, v)
    concat = o.transpose(0, 2, 1, 3).reshape(B, S, D)
    attn_out = lin(concat, raw["Wo"], raw["bo"])

    y = x + attn_out
    x2b = ln(y, raw["g2"], raw["bt2"])
    h = jax.nn.relu(lin(x2b, raw["W1"], raw["b1"]))
    f = lin(h, raw["W2"], raw["b2"])
    return y + f, probs


# ----------------------------------------------------------------------------
if __name__ == "__main__":
    # Small shapes consistent with the module (heads must divide d_model).
    B, S = 2, 8
    HEADS = 5
    D_MODEL = 40          # d_k = 8  (module default: d_model=300, heads=5)
    D_FF = 64             # module default 2048, shrunk for the small test

    key = jax.random.PRNGKey(0)
    ks = jax.random.split(key, 20)

    def init_linear(kw, kb, dout, din):
        bound = 1.0 / math.sqrt(din)
        w = jax.random.uniform(kw, (dout, din), jnp.float32, -bound, bound)
        b = jax.random.uniform(kb, (dout,), jnp.float32, -bound, bound)
        return w, b

    Wq, bq = init_linear(ks[0], ks[1], D_MODEL, D_MODEL)
    Wk, bk = init_linear(ks[2], ks[3], D_MODEL, D_MODEL)
    Wv, bv = init_linear(ks[4], ks[5], D_MODEL, D_MODEL)
    Wo, bo = init_linear(ks[6], ks[7], D_MODEL, D_MODEL)
    W1, b1 = init_linear(ks[8], ks[9], D_FF, D_MODEL)
    W2, b2 = init_linear(ks[10], ks[11], D_MODEL, D_FF)
    g1 = 1.0 + 0.1 * jax.random.normal(ks[12], (D_MODEL,), jnp.float32)
    bt1 = 0.1 * jax.random.normal(ks[13], (D_MODEL,), jnp.float32)
    g2 = 1.0 + 0.1 * jax.random.normal(ks[14], (D_MODEL,), jnp.float32)
    bt2 = 0.1 * jax.random.normal(ks[15], (D_MODEL,), jnp.float32)

    raw = dict(Wq=Wq, bq=bq, Wk=Wk, bk=bk, Wv=Wv, bv=bv, Wo=Wo, bo=bo,
               W1=W1, b1=b1, W2=W2, b2=b2, g1=g1, bt1=bt1, g2=g2, bt2=bt2)

    x = jax.random.normal(ks[16], (B, S, D_MODEL), jnp.float32)

    # Key-padding: batch 0 attends to all 8 keys, batch 1 only to the first 6.
    lengths = jnp.array([S, 6], dtype=jnp.int32)

    prepped = prepare_encoder_params(raw, HEADS)
    out, attn_w = encoder_layer_forward(x, lengths, prepped)
    out = jax.block_until_ready(out)
    attn_w = jax.block_until_ready(attn_w)

    # Reference uses the equivalent dense (B, S, S) mask, PyTorch-style, f32.
    valid = (jnp.arange(S)[None, :] < lengths[:, None]).astype(jnp.float32)   # (B, S)
    mask = jnp.broadcast_to(valid[:, None, :], (B, S, S))
    ref_out, ref_w = reference_encoder_layer(x, mask, raw, HEADS)

    assert out.shape == (B, S, D_MODEL)
    assert attn_w.shape == (B, HEADS, S, S)
    # Tolerances account for bf16 MXU operands + EUP approx reciprocal
    # (kernel) vs the full-f32 reference.
    assert jnp.allclose(out, ref_out, atol=5e-2, rtol=5e-2), \
        float(jnp.max(jnp.abs(out - ref_out)))
    assert jnp.allclose(attn_w, ref_w, atol=3e-2, rtol=3e-2), \
        float(jnp.max(jnp.abs(attn_w - ref_w)))

    print("KERNEL_OK")
</pallas_src>

<mosaic_0001>
module attributes {stable_mosaic.version = 11 : i64} {
  func.func @_attn_block_kernel(%arg0: i32, %arg1: memref<2xi32, #tpu.memory_space<smem>>, %arg2: memref<1x8x40xf32, #tpu.memory_space<vmem>>, %arg3: memref<1x40xf32, #tpu.memory_space<vmem>>, %arg4: memref<1x40xf32, #tpu.memory_space<vmem>>, %arg5: memref<40x1920xbf16, #tpu.memory_space<vmem>>, %arg6: memref<1x1920xf32, #tpu.memory_space<vmem>>, %arg7: memref<640x40xbf16, #tpu.memory_space<vmem>>, %arg8: memref<1x40xf32, #tpu.memory_space<vmem>>, %arg9: memref<1x8x40xf32, #tpu.memory_space<vmem>>, %arg10: memref<1x5x8x8xf32, #tpu.memory_space<vmem>>) attributes {dimension_semantics = [#tpu.dimension_semantics<parallel>], iteration_bounds = array<i64: 2>, scalar_prefetch = 1 : i64, scratch_operands = 0 : i64, tpu.core_type = #tpu.core_type<tc>, window_params = [{transform_indices = @transform_0, window_bounds = array<i64: 1, 8, 40>}, {pipeline_mode = #tpu.pipeline_mode<synchronous>, transform_indices = @transform_1, window_bounds = array<i64: 1, 40>}, {pipeline_mode = #tpu.pipeline_mode<synchronous>, transform_indices = @transform_2, window_bounds = array<i64: 1, 40>}, {pipeline_mode = #tpu.pipeline_mode<synchronous>, transform_indices = @transform_3, window_bounds = array<i64: 40, 1920>}, {pipeline_mode = #tpu.pipeline_mode<synchronous>, transform_indices = @transform_4, window_bounds = array<i64: 1, 1920>}, {pipeline_mode = #tpu.pipeline_mode<synchronous>, transform_indices = @transform_5, window_bounds = array<i64: 640, 40>}, {pipeline_mode = #tpu.pipeline_mode<synchronous>, transform_indices = @transform_6, window_bounds = array<i64: 1, 40>}, {transform_indices = @transform_7, window_bounds = array<i64: 1, 8, 40>}, {transform_indices = @transform_8, window_bounds = array<i64: 1, 5, 8, 8>}]} {
    %0 = arith.index_cast %arg0 : i32 to index
    %1 = memref.load %arg1[%0] : memref<2xi32, #tpu.memory_space<smem>>
    %c0 = arith.constant 0 : index
    %c0_0 = arith.constant 0 : index
    %c0_1 = arith.constant 0 : index
    %2 = vector.load %arg2[%c0, %c0_0, %c0_1] : memref<1x8x40xf32, #tpu.memory_space<vmem>>, vector<1x8x40xf32>
    %3 = vector.shape_cast %2 : vector<1x8x40xf32> to vector<8x40xf32>
    %c0_2 = arith.constant 0 : index
    %c0_3 = arith.constant 0 : index
    %4 = vector.load %arg3[%c0_2, %c0_3] : memref<1x40xf32, #tpu.memory_space<vmem>>, vector<1x40xf32>
    %c0_4 = arith.constant 0 : index
    %c0_5 = arith.constant 0 : index
    %5 = vector.load %arg4[%c0_4, %c0_5] : memref<1x40xf32, #tpu.memory_space<vmem>>, vector<1x40xf32>
    %cst = arith.constant dense<0.000000e+00> : vector<8xf32>
    %6 = vector.multi_reduction <add>, %3, %cst [1] : vector<8x40xf32> to vector<8xf32>
    %7 = vector.shape_cast %6 : vector<8xf32> to vector<8x1xf32>
    %cst_6 = arith.constant 4.000000e+01 : f32
    %8 = vector.broadcast %cst_6 : f32 to vector<8x1xf32>
    %9 = arith.divf %7, %8 : vector<8x1xf32>
    %10 = vector.broadcast %9 : vector<8x1xf32> to vector<8x40xf32>
    %11 = arith.subf %3, %10 : vector<8x40xf32>
    %12 = arith.mulf %11, %11 : vector<8x40xf32>
    %cst_7 = arith.constant dense<0.000000e+00> : vector<8xf32>
    %13 = vector.multi_reduction <add>, %12, %cst_7 [1] : vector<8x40xf32> to vector<8xf32>
    %14 = vector.shape_cast %13 : vector<8xf32> to vector<8x1xf32>
    %cst_8 = arith.constant 4.000000e+01 : f32
    %15 = vector.broadcast %cst_8 : f32 to vector<8x1xf32>
    %16 = arith.divf %14, %15 : vector<8x1xf32>
    %cst_9 = arith.constant 9.99999974E-6 : f32
    %17 = vector.broadcast %cst_9 : f32 to vector<8x1xf32>
    %18 = arith.addf %16, %17 : vector<8x1xf32>
    %19 = math.rsqrt %18 : vector<8x1xf32>
    %20 = vector.broadcast %9 : vector<8x1xf32> to vector<8x40xf32>
    %21 = arith.subf %3, %20 : vector<8x40xf32>
    %22 = vector.broadcast %19 : vector<8x1xf32> to vector<8x40xf32>
    %23 = arith.mulf %21, %22 : vector<8x40xf32>
    %24 = vector.broadcast %4 : vector<1x40xf32> to vector<8x40xf32>
    %25 = arith.mulf %23, %24 : vector<8x40xf32>
    %26 = vector.broadcast %5 : vector<1x40xf32> to vector<8x40xf32>
    %27 = arith.addf %25, %26 : vector<8x40xf32>
    %28 = arith.truncf %27 : vector<8x40xf32> to vector<8x40xbf16>
    %c0_10 = arith.constant 0 : index
    %c0_11 = arith.constant 0 : index
    %29 = vector.load %arg5[%c0_10, %c0_11] : memref<40x1920xbf16, #tpu.memory_space<vmem>>, vector<40x1920xbf16>
    %cst_12 = arith.constant dense<0.000000e+00> : vector<8x1920xf32>
    %30 = tpu.matmul %28, %29, %cst_12 {dimension_numbers = #tpu.dot_dimension_numbers<[1], [0], [0], [1], [0, 0, 1, 1], [], []>} : vector<8x40xbf16>, vector<40x1920xbf16>, vector<8x1920xf32> -> vector<8x1920xf32>
    %c0_13 = arith.constant 0 : index
    %c0_14 = arith.constant 0 : index
    %31 = vector.load %arg6[%c0_13, %c0_14] : memref<1x1920xf32, #tpu.memory_space<vmem>>, vector<1x1920xf32>
    %32 = vector.broadcast %31 : vector<1x1920xf32> to vector<8x1920xf32>
    %33 = arith.addf %30, %32 : vector<8x1920xf32>
    %34 = tpu.iota {dimensions = array<i32: 1>} : vector<1x8xi32>
    %35 = vector.broadcast %1 : i32 to vector<1x8xi32>
    %36 = arith.cmpi slt, %34, %35 : vector<1x8xi32>
    %cst_15 = arith.constant 0.000000e+00 : f32
    %37 = vector.broadcast %cst_15 : f32 to vector<8x40xf32>
    %38 = vector.extract_strided_slice %33 {offsets = [0, 0], sizes = [8, 128], strides = [1, 1]} : vector<8x1920xf32> to vector<8x128xf32>
    %39 = arith.truncf %38 : vector<8x128xf32> to vector<8x128xbf16>
    %40 = vector.extract_strided_slice %33 {offsets = [0, 640], sizes = [8, 128], strides = [1, 1]} : vector<8x1920xf32> to vector<8x128xf32>
    %41 = arith.truncf %40 : vector<8x128xf32> to vector<8x128xbf16>
    %42 = vector.extract_strided_slice %33 {offsets = [0, 1280], sizes = [8, 128], strides = [1, 1]} : vector<8x1920xf32> to vector<8x128xf32>
    %43 = arith.truncf %42 : vector<8x128xf32> to vector<8x128xbf16>
    %cst_16 = arith.constant dense<0.000000e+00> : vector<8x8xf32>
    %44 = tpu.matmul %39, %41, %cst_16 {dimension_numbers = #tpu.dot_dimension_numbers<[1], [1], [0], [0], [0, 0, 1, 0], [], []>} : vector<8x128xbf16>, vector<8x128xbf16>, vector<8x8xf32> -> vector<8x8xf32>
    %cst_17 = arith.constant 0.353553385 : f32
    %45 = vector.broadcast %cst_17 : f32 to vector<8x8xf32>
    %46 = arith.mulf %44, %45 : vector<8x8xf32>
    %cst_18 = arith.constant -1.000000e+09 : f32
    %47 = vector.shape_cast %36 : vector<1x8xi1> to vector<1x8xi1>
    %48 = vector.broadcast %47 : vector<1x8xi1> to vector<8x8xi1>
    %49 = vector.broadcast %cst_18 : f32 to vector<8x8xf32>
    %50 = arith.select %48, %46, %49 : vector<8x8xi1>, vector<8x8xf32>
    %cst_19 = arith.constant dense<0xFF800000> : vector<8xf32>
    %51 = vector.multi_reduction <maximumf>, %50, %cst_19 [1] : vector<8x8xf32> to vector<8xf32>
    %52 = vector.shape_cast %51 : vector<8xf32> to vector<8x1xf32>
    %53 = vector.broadcast %52 : vector<8x1xf32> to vector<8x8xf32>
    %54 = arith.subf %50, %53 : vector<8x8xf32>
    %55 = math.exp %54 : vector<8x8xf32>
    %cst_20 = arith.constant dense<0.000000e+00> : vector<8xf32>
    %56 = vector.multi_reduction <add>, %55, %cst_20 [1] : vector<8x8xf32> to vector<8xf32>
    %57 = vector.shape_cast %56 : vector<8xf32> to vector<8x1xf32>
    %58 = tpu.reciprocal %57 {approx = true} : vector<8x1xf32> -> vector<8x1xf32>
    %59 = vector.broadcast %58 : vector<8x1xf32> to vector<8x8xf32>
    %60 = arith.mulf %55, %59 : vector<8x8xf32>
    %c0_21 = arith.constant 0 : index
    %c0_22 = arith.constant 0 : index
    %c0_23 = arith.constant 0 : index
    %c0_24 = arith.constant 0 : index
    %61 = vector.load %arg10[%c0_21, %c0_22, %c0_23, %c0_24] : memref<1x5x8x8xf32, #tpu.memory_space<vmem>>, vector<1x1x8x8xf32>
    %62 = vector.shape_cast %61 : vector<1x1x8x8xf32> to vector<8x8xf32>
    %63 = vector.shape_cast %60 : vector<8x8xf32> to vector<1x1x8x8xf32>
    tpu.vector_store %arg10[%c0_21, %c0_22, %c0_23, %c0_24], %63 {strides = array<i32>} : memref<1x5x8x8xf32, #tpu.memory_space<vmem>>, vector<1x1x8x8xf32>,
    %64 = arith.truncf %60 : vector<8x8xf32> to vector<8x8xbf16>
    %cst_25 = arith.constant dense<0.000000e+00> : vector<8x128xf32>
    %65 = tpu.matmul %64, %43, %cst_25 {dimension_numbers = #tpu.dot_dimension_numbers<[1], [0], [0], [1], [0, 0, 1, 1], [], []>} : vector<8x8xbf16>, vector<8x128xbf16>, vector<8x128xf32> -> vector<8x128xf32>
    %66 = arith.truncf %65 : vector<8x128xf32> to vector<8x128xbf16>
    %c0_26 = arith.constant 0 : index
    %c0_27 = arith.constant 0 : index
    %67 = vector.load %arg7[%c0_26, %c0_27] : memref<640x40xbf16, #tpu.memory_space<vmem>>, vector<128x40xbf16>
    %cst_28 = arith.constant dense<0.000000e+00> : vector<8x40xf32>
    %68 = tpu.matmul %66, %67, %cst_28 {dimension_numbers = #tpu.dot_dimension_numbers<[1], [0], [0], [1], [0, 0, 1, 1], [], []>} : vector<8x128xbf16>, vector<128x40xbf16>, vector<8x40xf32> -> vector<8x40xf32>
    %69 = arith.addf %37, %68 : vector<8x40xf32>
    %70 = vector.extract_strided_slice %33 {offsets = [0, 128], sizes = [8, 128], strides = [1, 1]} : vector<8x1920xf32> to vector<8x128xf32>
    %71 = arith.truncf %70 : vector<8x128xf32> to vector<8x128xbf16>
    %72 = vector.extract_strided_slice %33 {offsets = [0, 768], sizes = [8, 128], strides = [1, 1]} : vector<8x1920xf32> to vector<8x128xf32>
    %73 = arith.truncf %72 : vector<8x128xf32> to vector<8x128xbf16>
    %74 = vector.extract_strided_slice %33 {offsets = [0, 1408], sizes = [8, 128], strides = [1, 1]} : vector<8x1920xf32> to vector<8x128xf32>
    %75 = arith.truncf %74 : vector<8x128xf32> to vector<8x128xbf16>
    %cst_29 = arith.constant dense<0.000000e+00> : vector<8x8xf32>
    %76 = tpu.matmul %71, %73, %cst_29 {dimension_numbers = #tpu.dot_dimension_numbers<[1], [1], [0], [0], [0, 0, 1, 0], [], []>} : vector<8x128xbf16>, vector<8x128xbf16>, vector<8x8xf32> -> vector<8x8xf32>
    %cst_30 = arith.constant 0.353553385 : f32
    %77 = vector.broadcast %cst_30 : f32 to vector<8x8xf32>
    %78 = arith.mulf %76, %77 : vector<8x8xf32>
    %cst_31 = arith.constant -1.000000e+09 : f32
    %79 = vector.shape_cast %36 : vector<1x8xi1> to vector<1x8xi1>
    %80 = vector.broadcast %79 : vector<1x8xi1> to vector<8x8xi1>
    %81 = vector.broadcast %cst_31 : f32 to vector<8x8xf32>
    %82 = arith.select %80, %78, %81 : vector<8x8xi1>, vector<8x8xf32>
    %cst_32 = arith.constant dense<0xFF800000> : vector<8xf32>
    %83 = vector.multi_reduction <maximumf>, %82, %cst_32 [1] : vector<8x8xf32> to vector<8xf32>
    %84 = vector.shape_cast %83 : vector<8xf32> to vector<8x1xf32>
    %85 = vector.broadcast %84 : vector<8x1xf32> to vector<8x8xf32>
    %86 = arith.subf %82, %85 : vector<8x8xf32>
    %87 = math.exp %86 : vector<8x8xf32>
    %cst_33 = arith.constant dense<0.000000e+00> : vector<8xf32>
    %88 = vector.multi_reduction <add>, %87, %cst_33 [1] : vector<8x8xf32> to vector<8xf32>
    %89 = vector.shape_cast %88 : vector<8xf32> to vector<8x1xf32>
    %90 = tpu.reciprocal %89 {approx = true} : vector<8x1xf32> -> vector<8x1xf32>
    %91 = vector.broadcast %90 : vector<8x1xf32> to vector<8x8xf32>
    %92 = arith.mulf %87, %91 : vector<8x8xf32>
    %c0_34 = arith.constant 0 : index
    %c1 = arith.constant 1 : index
    %c0_35 = arith.constant 0 : index
    %c0_36 = arith.constant 0 : index
    %93 = vector.load %arg10[%c0_34, %c1, %c0_35, %c0_36] : memref<1x5x8x8xf32, #tpu.memory_space<vmem>>, vector<1x1x8x8xf32>
    %94 = vector.shape_cast %93 : vector<1x1x8x8xf32> to vector<8x8xf32>
    %95 = vector.shape_cast %92 : vector<8x8xf32> to vector<1x1x8x8xf32>
    tpu.vector_store %arg10[%c0_34, %c1, %c0_35, %c0_36], %95 {strides = array<i32>} : memref<1x5x8x8xf32, #tpu.memory_space<vmem>>, vector<1x1x8x8xf32>,
    %96 = arith.truncf %92 : vector<8x8xf32> to vector<8x8xbf16>
    %cst_37 = arith.constant dense<0.000000e+00> : vector<8x128xf32>
    %97 = tpu.matmul %96, %75, %cst_37 {dimension_numbers = #tpu.dot_dimension_numbers<[1], [0], [0], [1], [0, 0, 1, 1], [], []>} : vector<8x8xbf16>, vector<8x128xbf16>, vector<8x128xf32> -> vector<8x128xf32>
    %98 = arith.truncf %97 : vector<8x128xf32> to vector<8x128xbf16>
    %c128 = arith.constant 128 : index
    %c0_38 = arith.constant 0 : index
    %99 = vector.load %arg7[%c128, %c0_38] : memref<640x40xbf16, #tpu.memory_space<vmem>>, vector<128x40xbf16>
    %cst_39 = arith.constant dense<0.000000e+00> : vector<8x40xf32>
    %100 = tpu.matmul %98, %99, %cst_39 {dimension_numbers = #tpu.dot_dimension_numbers<[1], [0], [0], [1], [0, 0, 1, 1], [], []>} : vector<8x128xbf16>, vector<128x40xbf16>, vector<8x40xf32> -> vector<8x40xf32>
    %101 = arith.addf %69, %100 : vector<8x40xf32>
    %102 = vector.extract_strided_slice %33 {offsets = [0, 256], sizes = [8, 128], strides = [1, 1]} : vector<8x1920xf32> to vector<8x128xf32>
    %103 = arith.truncf %102 : vector<8x128xf32> to vector<8x128xbf16>
    %104 = vector.extract_strided_slice %33 {offsets = [0, 896], sizes = [8, 128], strides = [1, 1]} : vector<8x1920xf32> to vector<8x128xf32>
    %105 = arith.truncf %104 : vector<8x128xf32> to vector<8x128xbf16>
    %106 = vector.extract_strided_slice %33 {offsets = [0, 1536], sizes = [8, 128], strides = [1, 1]} : vector<8x1920xf32> to vector<8x128xf32>
    %107 = arith.truncf %106 : vector<8x128xf32> to vector<8x128xbf16>
    %cst_40 = arith.constant dense<0.000000e+00> : vector<8x8xf32>
    %108 = tpu.matmul %103, %105, %cst_40 {dimension_numbers = #tpu.dot_dimension_numbers<[1], [1], [0], [0], [0, 0, 1, 0], [], []>} : vector<8x128xbf16>, vector<8x128xbf16>, vector<8x8xf32> -> vector<8x8xf32>
    %cst_41 = arith.constant 0.353553385 : f32
    %109 = vector.broadcast %cst_41 : f32 to vector<8x8xf32>
    %110 = arith.mulf %108, %109 : vector<8x8xf32>
    %cst_42 = arith.constant -1.000000e+09 : f32
    %111 = vector.shape_cast %36 : vector<1x8xi1> to vector<1x8xi1>
    %112 = vector.broadcast %111 : vector<1x8xi1> to vector<8x8xi1>
    %113 = vector.broadcast %cst_42 : f32 to vector<8x8xf32>
    %114 = arith.select %112, %110, %113 : vector<8x8xi1>, vector<8x8xf32>
    %cst_43 = arith.constant dense<0xFF800000> : vector<8xf32>
    %115 = vector.multi_reduction <maximumf>, %114, %cst_43 [1] : vector<8x8xf32> to vector<8xf32>
    %116 = vector.shape_cast %115 : vector<8xf32> to vector<8x1xf32>
    %117 = vector.broadcast %116 : vector<8x1xf32> to vector<8x8xf32>
    %118 = arith.subf %114, %117 : vector<8x8xf32>
    %119 = math.exp %118 : vector<8x8xf32>
    %cst_44 = arith.constant dense<0.000000e+00> : vector<8xf32>
    %120 = vector.multi_reduction <add>, %119, %cst_44 [1] : vector<8x8xf32> to vector<8xf32>
    %121 = vector.shape_cast %120 : vector<8xf32> to vector<8x1xf32>
    %122 = tpu.reciprocal %121 {approx = true} : vector<8x1xf32> -> vector<8x1xf32>
    %123 = vector.broadcast %122 : vector<8x1xf32> to vector<8x8xf32>
    %124 = arith.mulf %119, %123 : vector<8x8xf32>
    %c0_45 = arith.constant 0 : index
    %c2 = arith.constant 2 : index
    %c0_46 = arith.constant 0 : index
    %c0_47 = arith.constant 0 : index
    %125 = vector.load %arg10[%c0_45, %c2, %c0_46, %c0_47] : memref<1x5x8x8xf32, #tpu.memory_space<vmem>>, vector<1x1x8x8xf32>
    %126 = vector.shape_cast %125 : vector<1x1x8x8xf32> to vector<8x8xf32>
    %127 = vector.shape_cast %124 : vector<8x8xf32> to vector<1x1x8x8xf32>
    tpu.vector_store %arg10[%c0_45, %c2, %c0_46, %c0_47], %127 {strides = array<i32>} : memref<1x5x8x8xf32, #tpu.memory_space<vmem>>, vector<1x1x8x8xf32>,
    %128 = arith.truncf %124 : vector<8x8xf32> to vector<8x8xbf16>
    %cst_48 = arith.constant dense<0.000000e+00> : vector<8x128xf32>
    %129 = tpu.matmul %128, %107, %cst_48 {dimension_numbers = #tpu.dot_dimension_numbers<[1], [0], [0], [1], [0, 0, 1, 1], [], []>} : vector<8x8xbf16>, vector<8x128xbf16>, vector<8x128xf32> -> vector<8x128xf32>
    %130 = arith.truncf %129 : vector<8x128xf32> to vector<8x128xbf16>
    %c256 = arith.constant 256 : index
    %c0_49 = arith.constant 0 : index
    %131 = vector.load %arg7[%c256, %c0_49] : memref<640x40xbf16, #tpu.memory_space<vmem>>, vector<128x40xbf16>
    %cst_50 = arith.constant dense<0.000000e+00> : vector<8x40xf32>
    %132 = tpu.matmul %130, %131, %cst_50 {dimension_numbers = #tpu.dot_dimension_numbers<[1], [0], [0], [1], [0, 0, 1, 1], [], []>} : vector<8x128xbf16>, vector<128x40xbf16>, vector<8x40xf32> -> vector<8x40xf32>
    %133 = arith.addf %101, %132 : vector<8x40xf32>
    %134 = vector.extract_strided_slice %33 {offsets = [0, 384], sizes = [8, 128], strides = [1, 1]} : vector<8x1920xf32> to vector<8x128xf32>
    %135 = arith.truncf %134 : vector<8x128xf32> to vector<8x128xbf16>
    %136 = vector.extract_strided_slice %33 {offsets = [0, 1024], sizes = [8, 128], strides = [1, 1]} : vector<8x1920xf32> to vector<8x128xf32>
    %137 = arith.truncf %136 : vector<8x128xf32> to vector<8x128xbf16>
    %138 = vector.extract_strided_slice %33 {offsets = [0, 1664], sizes = [8, 128], strides = [1, 1]} : vector<8x1920xf32> to vector<8x128xf32>
    %139 = arith.truncf %138 : vector<8x128xf32> to vector<8x128xbf16>
    %cst_51 = arith.constant dense<0.000000e+00> : vector<8x8xf32>
    %140 = tpu.matmul %135, %137, %cst_51 {dimension_numbers = #tpu.dot_dimension_numbers<[1], [1], [0], [0], [0, 0, 1, 0], [], []>} : vector<8x128xbf16>, vector<8x128xbf16>, vector<8x8xf32> -> vector<8x8xf32>
    %cst_52 = arith.constant 0.353553385 : f32
    %141 = vector.broadcast %cst_52 : f32 to vector<8x8xf32>
    %142 = arith.mulf %140, %141 : vector<8x8xf32>
    %cst_53 = arith.constant -1.000000e+09 : f32
    %143 = vector.shape_cast %36 : vector<1x8xi1> to vector<1x8xi1>
    %144 = vector.broadcast %143 : vector<1x8xi1> to vector<8x8xi1>
    %145 = vector.broadcast %cst_53 : f32 to vector<8x8xf32>
    %146 = arith.select %144, %142, %145 : vector<8x8xi1>, vector<8x8xf32>
    %cst_54 = arith.constant dense<0xFF800000> : vector<8xf32>
    %147 = vector.multi_reduction <maximumf>, %146, %cst_54 [1] : vector<8x8xf32> to vector<8xf32>
    %148 = vector.shape_cast %147 : vector<8xf32> to vector<8x1xf32>
    %149 = vector.broadcast %148 : vector<8x1xf32> to vector<8x8xf32>
    %150 = arith.subf %146, %149 : vector<8x8xf32>
    %151 = math.exp %150 : vector<8x8xf32>
    %cst_55 = arith.constant dense<0.000000e+00> : vector<8xf32>
    %152 = vector.multi_reduction <add>, %151, %cst_55 [1] : vector<8x8xf32> to vector<8xf32>
    %153 = vector.shape_cast %152 : vector<8xf32> to vector<8x1xf32>
    %154 = tpu.reciprocal %153 {approx = true} : vector<8x1xf32> -> vector<8x1xf32>
    %155 = vector.broadcast %154 : vector<8x1xf32> to vector<8x8xf32>
    %156 = arith.mulf %151, %155 : vector<8x8xf32>
    %c0_56 = arith.constant 0 : index
    %c3 = arith.constant 3 : index
    %c0_57 = arith.constant 0 : index
    %c0_58 = arith.constant 0 : index
    %157 = vector.load %arg10[%c0_56, %c3, %c0_57, %c0_58] : memref<1x5x8x8xf32, #tpu.memory_space<vmem>>, vector<1x1x8x8xf32>
    %158 = vector.shape_cast %157 : vector<1x1x8x8xf32> to vector<8x8xf32>
    %159 = vector.shape_cast %156 : vector<8x8xf32> to vector<1x1x8x8xf32>
    tpu.vector_store %arg10[%c0_56, %c3, %c0_57, %c0_58], %159 {strides = array<i32>} : memref<1x5x8x8xf32, #tpu.memory_space<vmem>>, vector<1x1x8x8xf32>,
    %160 = arith.truncf %156 : vector<8x8xf32> to vector<8x8xbf16>
    %cst_59 = arith.constant dense<0.000000e+00> : vector<8x128xf32>
    %161 = tpu.matmul %160, %139, %cst_59 {dimension_numbers = #tpu.dot_dimension_numbers<[1], [0], [0], [1], [0, 0, 1, 1], [], []>} : vector<8x8xbf16>, vector<8x128xbf16>, vector<8x128xf32> -> vector<8x128xf32>
    %162 = arith.truncf %161 : vector<8x128xf32> to vector<8x128xbf16>
    %c384 = arith.constant 384 : index
    %c0_60 = arith.constant 0 : index
    %163 = vector.load %arg7[%c384, %c0_60] : memref<640x40xbf16, #tpu.memory_space<vmem>>, vector<128x40xbf16>
    %cst_61 = arith.constant dense<0.000000e+00> : vector<8x40xf32>
    %164 = tpu.matmul %162, %163, %cst_61 {dimension_numbers = #tpu.dot_dimension_numbers<[1], [0], [0], [1], [0, 0, 1, 1], [], []>} : vector<8x128xbf16>, vector<128x40xbf16>, vector<8x40xf32> -> vector<8x40xf32>
    %165 = arith.addf %133, %164 : vector<8x40xf32>
    %166 = vector.extract_strided_slice %33 {offsets = [0, 512], sizes = [8, 128], strides = [1, 1]} : vector<8x1920xf32> to vector<8x128xf32>
    %167 = arith.truncf %166 : vector<8x128xf32> to vector<8x128xbf16>
    %168 = vector.extract_strided_slice %33 {offsets = [0, 1152], sizes = [8, 128], strides = [1, 1]} : vector<8x1920xf32> to vector<8x128xf32>
    %169 = arith.truncf %168 : vector<8x128xf32> to vector<8x128xbf16>
    %170 = vector.extract_strided_slice %33 {offsets = [0, 1792], sizes = [8, 128], strides = [1, 1]} : vector<8x1920xf32> to vector<8x128xf32>
    %171 = arith.truncf %170 : vector<8x128xf32> to vector<8x128xbf16>
    %cst_62 = arith.constant dense<0.000000e+00> : vector<8x8xf32>
    %172 = tpu.matmul %167, %169, %cst_62 {dimension_numbers = #tpu.dot_dimension_numbers<[1], [1], [0], [0], [0, 0, 1, 0], [], []>} : vector<8x128xbf16>, vector<8x128xbf16>, vector<8x8xf32> -> vector<8x8xf32>
    %cst_63 = arith.constant 0.353553385 : f32
    %173 = vector.broadcast %cst_63 : f32 to vector<8x8xf32>
    %174 = arith.mulf %172, %173 : vector<8x8xf32>
    %cst_64 = arith.constant -1.000000e+09 : f32
    %175 = vector.shape_cast %36 : vector<1x8xi1> to vector<1x8xi1>
    %176 = vector.broadcast %175 : vector<1x8xi1> to vector<8x8xi1>
    %177 = vector.broadcast %cst_64 : f32 to vector<8x8xf32>
    %178 = arith.select %176, %174, %177 : vector<8x8xi1>, vector<8x8xf32>
    %cst_65 = arith.constant dense<0xFF800000> : vector<8xf32>
    %179 = vector.multi_reduction <maximumf>, %178, %cst_65 [1] : vector<8x8xf32> to vector<8xf32>
    %180 = vector.shape_cast %179 : vector<8xf32> to vector<8x1xf32>
    %181 = vector.broadcast %180 : vector<8x1xf32> to vector<8x8xf32>
    %182 = arith.subf %178, %181 : vector<8x8xf32>
    %183 = math.exp %182 : vector<8x8xf32>
    %cst_66 = arith.constant dense<0.000000e+00> : vector<8xf32>
    %184 = vector.multi_reduction <add>, %183, %cst_66 [1] : vector<8x8xf32> to vector<8xf32>
    %185 = vector.shape_cast %184 : vector<8xf32> to vector<8x1xf32>
    %186 = tpu.reciprocal %185 {approx = true} : vector<8x1xf32> -> vector<8x1xf32>
    %187 = vector.broadcast %186 : vector<8x1xf32> to vector<8x8xf32>
    %188 = arith.mulf %183, %187 : vector<8x8xf32>
    %c0_67 = arith.constant 0 : index
    %c4 = arith.constant 4 : index
    %c0_68 = arith.constant 0 : index
    %c0_69 = arith.constant 0 : index
    %189 = vector.load %arg10[%c0_67, %c4, %c0_68, %c0_69] : memref<1x5x8x8xf32, #tpu.memory_space<vmem>>, vector<1x1x8x8xf32>
    %190 = vector.shape_cast %189 : vector<1x1x8x8xf32> to vector<8x8xf32>
    %191 = vector.shape_cast %188 : vector<8x8xf32> to vector<1x1x8x8xf32>
    tpu.vector_store %arg10[%c0_67, %c4, %c0_68, %c0_69], %191 {strides = array<i32>} : memref<1x5x8x8xf32, #tpu.memory_space<vmem>>, vector<1x1x8x8xf32>,
    %192 = arith.truncf %188 : vector<8x8xf32> to vector<8x8xbf16>
    %cst_70 = arith.constant dense<0.000000e+00> : vector<8x128xf32>
    %193 = tpu.matmul %192, %171, %cst_70 {dimension_numbers = #tpu.dot_dimension_numbers<[1], [0], [0], [1], [0, 0, 1, 1], [], []>} : vector<8x8xbf16>, vector<8x128xbf16>, vector<8x128xf32> -> vector<8x128xf32>
    %194 = arith.truncf %193 : vector<8x128xf32> to vector<8x128xbf16>
    %c512 = arith.constant 512 : index
    %c0_71 = arith.constant 0 : index
    %195 = vector.load %arg7[%c512, %c0_71] : memref<640x40xbf16, #tpu.memory_space<vmem>>, vector<128x40xbf16>
    %cst_72 = arith.constant dense<0.000000e+00> : vector<8x40xf32>
    %196 = tpu.matmul %194, %195, %cst_72 {dimension_numbers = #tpu.dot_dimension_numbers<[1], [0], [0], [1], [0, 0, 1, 1], [], []>} : vector<8x128xbf16>, vector<128x40xbf16>, vector<8x40xf32> -> vector<8x40xf32>
    %197 = arith.addf %165, %196 : vector<8x40xf32>
    %198 = arith.addf %3, %197 : vector<8x40xf32>
    %c0_73 = arith.constant 0 : index
    %c0_74 = arith.constant 0 : index
    %199 = vector.load %arg8[%c0_73, %c0_74] : memref<1x40xf32, #tpu.memory_space<vmem>>, vector<1x40xf32>
    %200 = vector.broadcast %199 : vector<1x40xf32> to vector<8x40xf32>
    %201 = arith.addf %198, %200 : vector<8x40xf32>
    %c0_75 = arith.constant 0 : index
    %c0_76 = arith.constant 0 : index
    %c0_77 = arith.constant 0 : index
    %202 = vector.load %arg9[%c0_75, %c0_76, %c0_77] : memref<1x8x40xf32, #tpu.memory_space<vmem>>, vector<1x8x40xf32>
    %203 = vector.shape_cast %202 : vector<1x8x40xf32> to vector<8x40xf32>
    %204 = vector.shape_cast %201 : vector<8x40xf32> to vector<1x8x40xf32>
    tpu.vector_store %arg9[%c0_75, %c0_76, %c0_77], %204 {strides = array<i32>} : memref<1x8x40xf32, #tpu.memory_space<vmem>>, vector<1x8x40xf32>,
    return
  }
  func.func @transform_0(%arg0: i32, %arg1: memref<2xi32, #tpu.memory_space<smem>>) -> (i32, i32, i32) {
    %c0_i32 = arith.constant 0 : i32
    %c0_i32_0 = arith.constant 0 : i32
    %c0_i32_1 = arith.constant 0 : i32
    return %arg0, %c0_i32, %c0_i32_0 : i32, i32, i32
  }
  func.func @transform_1(%arg0: i32, %arg1: memref<2xi32, #tpu.memory_space<smem>>) -> (i32, i32) {
    %c0_i32 = arith.constant 0 : i32
    %c0_i32_0 = arith.constant 0 : i32
    %c0_i32_1 = arith.constant 0 : i32
    return %c0_i32, %c0_i32_0 : i32, i32
  }
  func.func @transform_2(%arg0: i32, %arg1: memref<2xi32, #tpu.memory_space<smem>>) -> (i32, i32) {
    %c0_i32 = arith.constant 0 : i32
    %c0_i32_0 = arith.constant 0 : i32
    %c0_i32_1 = arith.constant 0 : i32
    return %c0_i32, %c0_i32_0 : i32, i32
  }
  func.func @transform_3(%arg0: i32, %arg1: memref<2xi32, #tpu.memory_space<smem>>) -> (i32, i32) {
    %c0_i32 = arith.constant 0 : i32
    %c0_i32_0 = arith.constant 0 : i32
    %c0_i32_1 = arith.constant 0 : i32
    return %c0_i32, %c0_i32_0 : i32, i32
  }
  func.func @transform_4(%arg0: i32, %arg1: memref<2xi32, #tpu.memory_space<smem>>) -> (i32, i32) {
    %c0_i32 = arith.constant 0 : i32
    %c0_i32_0 = arith.constant 0 : i32
    %c0_i32_1 = arith.constant 0 : i32
    return %c0_i32, %c0_i32_0 : i32, i32
  }
  func.func @transform_5(%arg0: i32, %arg1: memref<2xi32, #tpu.memory_space<smem>>) -> (i32, i32) {
    %c0_i32 = arith.constant 0 : i32
    %c0_i32_0 = arith.constant 0 : i32
    %c0_i32_1 = arith.constant 0 : i32
    return %c0_i32, %c0_i32_0 : i32, i32
  }
  func.func @transform_6(%arg0: i32, %arg1: memref<2xi32, #tpu.memory_space<smem>>) -> (i32, i32) {
    %c0_i32 = arith.constant 0 : i32
    %c0_i32_0 = arith.constant 0 : i32
    %c0_i32_1 = arith.constant 0 : i32
    return %c0_i32, %c0_i32_0 : i32, i32
  }
  func.func @transform_7(%arg0: i32, %arg1: memref<2xi32, #tpu.memory_space<smem>>) -> (i32, i32, i32) {
    %c0_i32 = arith.constant 0 : i32
    %c0_i32_0 = arith.constant 0 : i32
    %c0_i32_1 = arith.constant 0 : i32
    return %arg0, %c0_i32, %c0_i32_0 : i32, i32, i32
  }
  func.func @transform_8(%arg0: i32, %arg1: memref<2xi32, #tpu.memory_space<smem>>) -> (i32, i32, i32, i32) {
    %c0_i32 = arith.constant 0 : i32
    %c0_i32_0 = arith.constant 0 : i32
    %c0_i32_1 = arith.constant 0 : i32
    %c0_i32_2 = arith.constant 0 : i32
    return %arg0, %c0_i32, %c0_i32_0, %c0_i32_1 : i32, i32, i32, i32
  }
}

</mosaic_0001>

<llo_original>
// kernel: tpu_custom_call.1
$region0: #{tpu_custom_call.1}
  #allocation0 [shape = 'u32[]', space=smem, size = 0x4, offset = 0x4, fixed_abs, tag = 'smem constant byte address 0x4 - core index']
  #allocation1 [shape = 'u32[144,128]{1,0:T(1,128)}', space=vmem, size = 0x12000, scoped, tag = 'internal scratch']
  #allocation2 [shape = 's32[1]{0}', space=sflag, size = 0x4, scoped, tag = 'scoped memory for tpu_custom_call.1']
  #allocation3 [shape = 'u8[512]{0}', space=smem, size = 0x200, scoped, tag = 'prefetched SMEM operand 0']
  %s0 = inlined_call_operand.vmem [shape: s32[2], index: 0, kind: input, shape index: {}]
  %s1 = inlined_call_operand.vmem [shape: f32[2,8,40], index: 1, kind: input, shape index: {}]
  %s2 = inlined_call_operand.vmem [shape: f32[1,40], index: 2, kind: input, shape index: {}]
  %s3 = inlined_call_operand.vmem [shape: f32[1,40], index: 3, kind: input, shape index: {}]
  %s4 = inlined_call_operand.vmem [shape: bf16[40,1920], index: 4, kind: input, shape index: {}]
  %s5 = inlined_call_operand.vmem [shape: f32[1,1920], index: 5, kind: input, shape index: {}]
  %s6 = inlined_call_operand.vmem [shape: bf16[640,40], index: 6, kind: input, shape index: {}]
  %s7 = inlined_call_operand.vmem [shape: f32[1,40], index: 7, kind: input, shape index: {}]
  %s8 = inlined_call_operand.hbm [shape: f32[2,8,40], index: 8, kind: output, shape index: {0}]
  %s9 = inlined_call_operand.hbm [shape: f32[2,5,8,8], index: 9, kind: output, shape index: {1}]
  %10 = xla_tuple %s8, %s9
  %s11 = sld [smem:[#allocation0]]
  $region69: #{tpu_custom_call.1} parent=0
    _
  %s13 = ssub.s32 1, %s11
  %s14 = scalar_select 0, %s13, %s11
  %s15 = sshll.u32 %s0, 4
  %s16 = int_to_ptr.vmem [resolvable:$true] %s15
  %18 = dma.vmem_to_smem %s16, 16, [#allocation3], [#allocation2]
  %19 = dma.done [#allocation2], 16
  %20 = sfence
  $region1: #{tpu_custom_call.1} parent=0
    #allocation4 [shape = 'u8[8192]{0}', space=vmem, size = 0x2000, scoped, tag = 'output window, operand 0']
    #allocation5 [shape = 's32[2]{0}', space=sflag, size = 0x8, scoped, tag = 'scoped memory for tpu_custom_call.1']
    #allocation6 [shape = 'u8[40960]{0}', space=vmem, size = 0xa000, scoped, tag = 'output window, operand 1']
    #allocation7 [shape = 's32[2]{0}', space=sflag, size = 0x8, scoped, tag = 'scoped memory for tpu_custom_call.1']
    %21 = vsyncpa [#allocation5], 0
    %s22 = scalar_lea.sflag [#allocation5], 1
    %23 = vsyncpa %s22, 0
    %24 = vsyncpa [#allocation7], 0
    %s25 = scalar_lea.sflag [#allocation7], 1
    %26 = vsyncpa %s25, 0
    loop: start=0, step=1, limit=4
    $region2: #{tpu_custom_call.1} parent=1 // loop_pre_header
      _
    $region3: #{tpu_custom_call.1} parent=1 // loop_header
      %s28 = sphi 0, %s32
      %p29 = scmp.ge.s32.totalorder %s28, 4
      %s38 = sphi 0, %s40
      %s41 = sphi 0, %s38
      %s42 = sphi 0, %s41
      %s58 = sphi 0, %s42
      %s62 = sphi 0, %s62
      %s64 = sphi 0, %s62
      %s65 = sphi 0, %s64
      %s79 = sphi 0, %s65
      %s83 = sphi 0, %s83
      %s85 = sphi 0, %s83
      %s86 = sphi 0, %s85
      %s100 = sphi 0, %s86
      %s104 = sphi 0, %s104
      %s106 = sphi 0, %s104
      %s107 = sphi 0, %s106
      %s121 = sphi 0, %s107
      %s125 = sphi 0, %s125
      %s127 = sphi 0, %s125
      %s128 = sphi 0, %s127
      %s142 = sphi 0, %s128
      %s146 = sphi 0, %s146
      %s148 = sphi 0, %s146
      %s149 = sphi 0, %s148
      %s163 = sphi 0, %s149
      %s167 = sphi 0, %s167
      %s169 = sphi 0, %s167
      %s170 = sphi 0, %s169
      %s184 = sphi 0, %s170
      %s190 = sphi 0, %s192
      %s193 = sphi 0, %s190
      %s194 = sphi 0, %s193
      %s210 = sphi 0, %s194
      %s216 = sphi 0, %s218
      %s219 = sphi 0, %s216
      %s220 = sphi 0, %s219
      %s236 = sphi 0, %s220
    $region4: #{tpu_custom_call.1} parent=1 // loop_header_branch
      %31 = sbr.rel (%p29) target = $region8
    $region5: #{tpu_custom_call.1} parent=1 // loop_body
      %s33 = ssub.s32 %s28, 1
      %s34 = ssub.s32 %s28, 2
      %s35 = sadd.s32 %s28, 1
      %s36 = ssub.s32 %s28, %s35
      %p37 = scmp.eq.s32.totalorder %s36, 0
      %s39 = sadd.s32 %s38, 1
      %s40 = scalar_select %p37, %s38, %s39
      %p43 = pneg %p37
      %p44 = scmp.eq.s32.totalorder %s28, 1
      %p45 = por %p43, %p44
      %p46 = scmp.ne.s32.totalorder %s38, %s41
      %p47 = scmp.eq.s32.totalorder %s28, 0
      %p48 = por %p46, %p47
      %p49 = scmp.ne.s32.totalorder %s38, %s41
      %p50 = scmp.eq.s32.totalorder %s33, 1
      %p51 = por %p49, %p50
      %p52 = scmp.ne.s32.totalorder %s41, %s42
      %p53 = scmp.eq.s32.totalorder %s33, 0
      %p54 = por %p52, %p53
      %p55 = scmp.ne.s32.totalorder %s41, %s42
      %p56 = scmp.eq.s32.totalorder %s34, 1
      %p57 = por %p55, %p56
      %p59 = scmp.ne.s32.totalorder %s42, %s58
      %p60 = scmp.eq.s32.totalorder %s34, 0
      %p61 = por %p59, %p60
      %s63 = sadd.s32 %s62, 1
      %p66 = scmp.eq.s32.totalorder %s28, 1
      %p67 = scmp.ne.s32.totalorder %s62, %s64
      %p68 = scmp.eq.s32.totalorder %s28, 0
      %p69 = por %p67, %p68
      %p70 = scmp.ne.s32.totalorder %s62, %s64
      %p71 = scmp.eq.s32.totalorder %s33, 1
      %p72 = por %p70, %p71
      %p73 = scmp.ne.s32.totalorder %s64, %s65
      %p74 = scmp.eq.s32.totalorder %s33, 0
      %p75 = por %p73, %p74
      %p76 = scmp.ne.s32.totalorder %s64, %s65
      %p77 = scmp.eq.s32.totalorder %s34, 1
      %p78 = por %p76, %p77
      %p80 = scmp.ne.s32.totalorder %s65, %s79
      %p81 = scmp.eq.s32.totalorder %s34, 0
      %p82 = por %p80, %p81
      %s84 = sadd.s32 %s83, 1
      %p87 = scmp.eq.s32.totalorder %s28, 1
      %p88 = scmp.ne.s32.totalorder %s83, %s85
      %p89 = scmp.eq.s32.totalorder %s28, 0
      %p90 = por %p88, %p89
      %p91 = scmp.ne.s32.totalorder %s83, %s85
      %p92 = scmp.eq.s32.totalorder %s33, 1
      %p93 = por %p91, %p92
      %p94 = scmp.ne.s32.totalorder %s85, %s86
      %p95 = scmp.eq.s32.totalorder %s33, 0
      %p96 = por %p94, %p95
      %p97 = scmp.ne.s32.totalorder %s85, %s86
      %p98 = scmp.eq.s32.totalorder %s34, 1
      %p99 = por %p97, %p98
      %p101 = scmp.ne.s32.totalorder %s86, %s100
      %p102 = scmp.eq.s32.totalorder %s34, 0
      %p103 = por %p101, %p102
      %s105 = sadd.s32 %s104, 1
      %p108 = scmp.eq.s32.totalorder %s28, 1
      %p109 = scmp.ne.s32.totalorder %s104, %s106
      %p110 = scmp.eq.s32.totalorder %s28, 0
      %p111 = por %p109, %p110
      %p112 = scmp.ne.s32.totalorder %s104, %s106
      %p113 = scmp.eq.s32.totalorder %s33, 1
      %p114 = por %p112, %p113
      %p115 = scmp.ne.s32.totalorder %s106, %s107
      %p116 = scmp.eq.s32.totalorder %s33, 0
      %p117 = por %p115, %p116
      %p118 = scmp.ne.s32.totalorder %s106, %s107
      %p119 = scmp.eq.s32.totalorder %s34, 1
      %p120 = por %p118, %p119
      %p122 = scmp.ne.s32.totalorder %s107, %s121
      %p123 = scmp.eq.s32.totalorder %s34, 0
      %p124 = por %p122, %p123
      %s126 = sadd.s32 %s125, 1
      %p129 = scmp.eq.s32.totalorder %s28, 1
      %p130 = scmp.ne.s32.totalorder %s125, %s127
      %p131 = scmp.eq.s32.totalorder %s28, 0
      %p132 = por %p130, %p131
      %p133 = scmp.ne.s32.totalorder %s125, %s127
      %p134 = scmp.eq.s32.totalorder %s33, 1
      %p135 = por %p133, %p134
      %p136 = scmp.ne.s32.totalorder %s127, %s128
      %p137 = scmp.eq.s32.totalorder %s33, 0
      %p138 = por %p136, %p137
      %p139 = scmp.ne.s32.totalorder %s127, %s128
      %p140 = scmp.eq.s32.totalorder %s34, 1
      %p141 = por %p139, %p140
      %p143 = scmp.ne.s32.totalorder %s128, %s142
      %p144 = scmp.eq.s32.totalorder %s34, 0
      %p145 = por %p143, %p144
      %s147 = sadd.s32 %s146, 1
      %p150 = scmp.eq.s32.totalorder %s28, 1
      %p151 = scmp.ne.s32.totalorder %s146, %s148
      %p152 = scmp.eq.s32.totalorder %s28, 0
      %p153 = por %p151, %p152
      %p154 = scmp.ne.s32.totalorder %s146, %s148
      %p155 = scmp.eq.s32.totalorder %s33, 1
      %p156 = por %p154, %p155
      %p157 = scmp.ne.s32.totalorder %s148, %s149
      %p158 = scmp.eq.s32.totalorder %s33, 0
      %p159 = por %p157, %p158
      %p160 = scmp.ne.s32.totalorder %s148, %s149
      %p161 = scmp.eq.s32.totalorder %s34, 1
      %p162 = por %p160, %p161
      %p164 = scmp.ne.s32.totalorder %s149, %s163
      %p165 = scmp.eq.s32.totalorder %s34, 0
      %p166 = por %p164, %p165
      %s168 = sadd.s32 %s167, 1
      %p171 = scmp.eq.s32.totalorder %s28, 1
      %p172 = scmp.ne.s32.totalorder %s167, %s169
      %p173 = scmp.eq.s32.totalorder %s28, 0
      %p174 = por %p172, %p173
      %p175 = scmp.ne.s32.totalorder %s167, %s169
      %p176 = scmp.eq.s32.totalorder %s33, 1
      %p177 = por %p175, %p176
      %p178 = scmp.ne.s32.totalorder %s169, %s170
      %p179 = scmp.eq.s32.totalorder %s33, 0
      %p180 = por %p178, %p179
      %p181 = scmp.ne.s32.totalorder %s169, %s170
      %p182 = scmp.eq.s32.totalorder %s34, 1
      %p183 = por %p181, %p182
      %p185 = scmp.ne.s32.totalorder %s170, %s184
      %p186 = scmp.eq.s32.totalorder %s34, 0
      %p187 = por %p185, %p186
      %s188 = ssub.s32 %s28, %s35
      %p189 = scmp.eq.s32.totalorder %s188, 0
      %s191 = sadd.s32 %s190, 1
      %s192 = scalar_select %p189, %s190, %s191
      %p195 = pneg %p189
      %p196 = scmp.eq.s32.totalorder %s28, 1
      %p197 = por %p195, %p196
      %p198 = scmp.ne.s32.totalorder %s190, %s193
      %p199 = scmp.eq.s32.totalorder %s28, 0
      %p200 = por %p198, %p199
      %p201 = scmp.ne.s32.totalorder %s190, %s193
      %p202 = scmp.eq.s32.totalorder %s33, 1
      %p203 = por %p201, %p202
      %p204 = scmp.ne.s32.totalorder %s193, %s194
      %p205 = scmp.eq.s32.totalorder %s33, 0
      %p206 = por %p204, %p205
      %p207 = scmp.ne.s32.totalorder %s193, %s194
      %p208 = scmp.eq.s32.totalorder %s34, 1
      %p209 = por %p207, %p208
      %p211 = scmp.ne.s32.totalorder %s194, %s210
      %p212 = scmp.eq.s32.totalorder %s34, 0
      %p213 = por %p211, %p212
      %s214 = ssub.s32 %s28, %s35
      %p215 = scmp.eq.s32.totalorder %s214, 0
      %s217 = sadd.s32 %s216, 1
      %s218 = scalar_select %p215, %s216, %s217
      %p221 = pneg %p215
      %p222 = scmp.eq.s32.totalorder %s28, 1
      %p223 = por %p221, %p222
      %p224 = scmp.ne.s32.totalorder %s216, %s219
      %p225 = scmp.eq.s32.totalorder %s28, 0
      %p226 = por %p224, %p225
      %p227 = scmp.ne.s32.totalorder %s216, %s219
      %p228 = scmp.eq.s32.totalorder %s33, 1
      %p229 = por %p227, %p228
      %p230 = scmp.ne.s32.totalorder %s219, %s220
      %p231 = scmp.eq.s32.totalorder %s33, 0
      %p232 = por %p230, %p231
      %p233 = scmp.ne.s32.totalorder %s219, %s220
      %p234 = scmp.eq.s32.totalorder %s34, 1
      %p235 = por %p233, %p234
      %p237 = scmp.ne.s32.totalorder %s220, %s236
      %p238 = scmp.eq.s32.totalorder %s34, 0
      %p239 = por %p237, %p238
      %p240 = scmp.le.s32.totalorder 1, %s28
      %p241 = scmp.lt.s32.totalorder %s28, 3
      %p242 = pnand %p240, %p241
      %p243 = pneg %p242
      // Predicated region
      $region9: #{tpu_custom_call.1} parent=5 // pred_check
        _
      $region10: #{tpu_custom_call.1} parent=5 // pred_check_branch
        %245 = sbr.rel (%p242) target = $region12
      $region11: #{tpu_custom_call.1} parent=5 // pred_region
        %s246 = ssub.s32 %s28, 1
        // Predicated region
        $region13: #{tpu_custom_call.1} parent=11 // pred_check
          %p247 = pneg %p75
        $region14: #{tpu_custom_call.1} parent=11 // pred_check_branch
          %249 = sbr.rel (%p247) target = $region16
        $region15: #{tpu_custom_call.1} parent=11 // pred_region
          _
        $region16: #{tpu_custom_call.1} parent=11 // pred_fallthru
          _
        // Predicated region
        $region17: #{tpu_custom_call.1} parent=11 // pred_check
          %p250 = pneg %p96
        $region18: #{tpu_custom_call.1} parent=11 // pred_check_branch
          %252 = sbr.rel (%p250) target = $region20
        $region19: #{tpu_custom_call.1} parent=11 // pred_region
          _
        $region20: #{tpu_custom_call.1} parent=11 // pred_fallthru
          _
        // Predicated region
        $region21: #{tpu_custom_call.1} parent=11 // pred_check
          %p253 = pneg %p117
        $region22: #{tpu_custom_call.1} parent=11 // pred_check_branch
          %255 = sbr.rel (%p253) target = $region24
        $region23: #{tpu_custom_call.1} parent=11 // pred_region
          _
        $region24: #{tpu_custom_call.1} parent=11 // pred_fallthru
          _
        // Predicated region
        $region25: #{tpu_custom_call.1} parent=11 // pred_check
          %p256 = pneg %p138
        $region26: #{tpu_custom_call.1} parent=11 // pred_check_branch
          %258 = sbr.rel (%p256) target = $region28
        $region27: #{tpu_custom_call.1} parent=11 // pred_region
          _
        $region28: #{tpu_custom_call.1} parent=11 // pred_fallthru
          _
        // Predicated region
        $region29: #{tpu_custom_call.1} parent=11 // pred_check
          %p259 = pneg %p159
        $region30: #{tpu_custom_call.1} parent=11 // pred_check_branch
          %261 = sbr.rel (%p259) target = $region32
        $region31: #{tpu_custom_call.1} parent=11 // pred_region
          _
        $region32: #{tpu_custom_call.1} parent=11 // pred_fallthru
          _
        // Predicated region
        $region33: #{tpu_custom_call.1} parent=11 // pred_check
          %p262 = pneg %p180
        $region34: #{tpu_custom_call.1} parent=11 // pred_check_branch
          %264 = sbr.rel (%p262) target = $region36
        $region35: #{tpu_custom_call.1} parent=11 // pred_region
          _
        $region36: #{tpu_custom_call.1} parent=11 // pred_fallthru
          _
      $region12: #{tpu_custom_call.1} parent=5 // pred_fallthru
        _
      %p265 = scmp.lt.s32.totalorder %s28, 2
      // Predicated region
      $region37: #{tpu_custom_call.1} parent=5 // pred_check
        %p266 = pneg %p265
      $region38: #{tpu_custom_call.1} parent=5 // pred_check_branch
        %268 = sbr.rel (%p266) target = $region40
      $region39: #{tpu_custom_call.1} parent=5 // pred_region
        // Predicated region
        $region41: #{tpu_custom_call.1} parent=39 // pred_check
          %p269 = pneg %p48
        $region42: #{tpu_custom_call.1} parent=39 // pred_check_branch
          %271 = sbr.rel (%p269) target = $region44
        $region43: #{tpu_custom_call.1} parent=39 // pred_region
          %p272 = scmp.lt.s32.totalorder %s28, 1
          %s273 = scalar_select %p272, %s28, 1
          %s274 = smul.addr %s273, 8
          %s275 = scalar_lea.vmem %s1, %s274
        $region44: #{tpu_custom_call.1} parent=39 // pred_fallthru
          _
      $region40: #{tpu_custom_call.1} parent=5 // pred_fallthru
        _
      %p276 = scmp.le.s32.totalorder 1, %s28
      %p277 = scmp.lt.s32.totalorder %s28, 3
      %p278 = pnand %p276, %p277
      %p279 = pneg %p278
      // Predicated region
      $region45: #{tpu_custom_call.1} parent=5 // pred_check
        _
      $region46: #{tpu_custom_call.1} parent=5 // pred_check_branch
        %281 = sbr.rel (%p278) target = $region48
      $region47: #{tpu_custom_call.1} parent=5 // pred_region
        %s282 = ssub.s32 %s28, 1
        %p283 = scmp.lt.s32.totalorder %s33, 1
        %s284 = scalar_select %p283, %s33, 1
        %s285 = smul.addr %s284, 8
        %s286 = scalar_lea.vmem %s1, %s285
        %p287 = pneg %p54
        %p288 = pneg %p51
        %p289 = pneg %p75
        %p290 = pneg %p72
        %p291 = pneg %p96
        %p292 = pneg %p93
        %p293 = pneg %p117
        %p294 = pneg %p114
        %p295 = pneg %p138
        %p296 = pneg %p135
        %p297 = pneg %p159
        %p298 = pneg %p156
        %p299 = pneg %p180
        %p300 = pneg %p177
        %p301 = pneg %p206
        %p302 = pneg %p203
        %s303 = sand.u32 %s193, 1
        %s304 = scalar_lea.sflag [#allocation5], %s303
        %s305 = sand.u32 %s193, 1
        %s306 = smul.addr %s305, 8
        %s307 = scalar_lea.vmem [#allocation4], %s306
        %p308 = pneg %p232
        %p309 = pneg %p229
        %s310 = sand.u32 %s219, 1
        %s311 = scalar_lea.sflag [#allocation7], %s310
        %s312 = sand.u32 %s219, 1
        %s313 = smul.addr %s312, 40
        %s314 = scalar_lea.vmem [#allocation6], %s313
        %p315 = scmp.lt.s32.totalorder %s33, 1
        %s316 = scalar_select %p315, %s33, 1
        %s317 = smul.addr %s316, 8
        %s318 = scalar_lea.vmem %s1, %s317
        %s320 = sld [smem:[#allocation3 + %s33]]
        %v321 = vld [vmem:[%s318] sm:$0xff]
        %v322 = vld [vmem:[%s2] sm:$0x1]
        %v323 = vld [vmem:[%s3] sm:$0x1]
        %vm324 = vcmask 326656
        %v325 = vsel %vm324, %v321, 0.0
        %326 = vadd.xlane.f32.xlu0 %v325
        %v327 = vpop.xlane.xlu0 %326
        %v328 = vrcp.pop 40.0
        %v329 = vmul.f32 %v327, %v328
        %v330 = vsub.f32 %v321, %v329
        %v331 = vmul.f32 %v330, %v330
        %v332 = vsel %vm324, %v331, 0.0
        %333 = vadd.xlane.f32.xlu0 %v332
        %v334 = vpop.xlane.xlu0 %333
        %v335 = vmul.f32 %v334, %v328
        %v336 = vadd.f32 %v335, 1e-05
        %v337 = vrsqrt.pop %v336
        %v338 = vmul.f32 %v330, %v337
        %v340 = vlaneseq
        %v341 = vshrl.u32 %v340, 7
        %v342 = vsub.s32 0, %v341
        %v343 = vrot.slane %v322, %v342
        %v345 = vmul.f32 %v338, %v343
        %v347 = vlaneseq
        %v348 = vshrl.u32 %v347, 7
        %v349 = vsub.s32 0, %v348
        %v350 = vrot.slane %v323, %v349
        %v352 = vadd.f32 %v345, %v350
        %v353 = vpack.c.bf16 %v352, %v352
        %v354 = vld [vmem:[%s4] sm:$0xff]
        %v355 = vld [vmem:[%s4 + $0x8] sm:$0xff]
        %v356 = vld [vmem:[%s4 + $0x10] sm:$0xff]
        %v357 = vld [vmem:[%s4 + $0x18] sm:$0xff]
        %v358 = vld [vmem:[%s4 + $0x20] sm:$0xff]
        %v359 = vld [vmem:[%s4 + $0x28] sm:$0xff]
        %v360 = vld [vmem:[%s4 + $0x30] sm:$0xff]
        %v361 = vld [vmem:[%s4 + $0x38] sm:$0xf]
        %v362 = vld [vmem:[%s4 + $0x3c] sm:$0xff]
        %v363 = vld [vmem:[%s4 + $0x44] sm:$0xff]
        %v364 = vld [vmem:[%s4 + $0x4c] sm:$0xff]
        %v365 = vld [vmem:[%s4 + $0x54] sm:$0xff]
        %v366 = vld [vmem:[%s4 + $0x5c] sm:$0xff]
        %v367 = vld [vmem:[%s4 + $0x64] sm:$0xff]
        %v368 = vld [vmem:[%s4 + $0x6c] sm:$0xff]
        %v369 = vld [vmem:[%s4 + $0x74] sm:$0xf]
        %v370 = vld [vmem:[%s4 + $0x78] sm:$0xff]
        %v371 = vld [vmem:[%s4 + $0x80] sm:$0xff]
        %v372 = vld [vmem:[%s4 + $0x88] sm:$0xff]
        %v373 = vld [vmem:[%s4 + $0x90] sm:$0xff]
        %v374 = vld [vmem:[%s4 + $0x98] sm:$0xff]
        %v375 = vld [vmem:[%s4 + $0xa0] sm:$0xff]
        %v376 = vld [vmem:[%s4 + $0xa8] sm:$0xff]
        %v377 = vld [vmem:[%s4 + $0xb0] sm:$0xf]
        %v378 = vld [vmem:[%s4 + $0xb4] sm:$0xff]
        %v379 = vld [vmem:[%s4 + $0xbc] sm:$0xff]
        %v380 = vld [vmem:[%s4 + $0xc4] sm:$0xff]
        %v381 = vld [vmem:[%s4 + $0xcc] sm:$0xff]
        %v382 = vld [vmem:[%s4 + $0xd4] sm:$0xff]
        %v383 = vld [vmem:[%s4 + $0xdc] sm:$0xff]
        %v384 = vld [vmem:[%s4 + $0xe4] sm:$0xff]
        %v385 = vld [vmem:[%s4 + $0xec] sm:$0xf]
        %v386 = vld [vmem:[%s4 + $0xf0] sm:$0xff]
        %v387 = vld [vmem:[%s4 + $0xf8] sm:$0xff]
        %v388 = vld [vmem:[%s4 + $0x100] sm:$0xff]
        %v389 = vld [vmem:[%s4 + $0x108] sm:$0xff]
        %v390 = vld [vmem:[%s4 + $0x110] sm:$0xff]
        %v391 = vld [vmem:[%s4 + $0x118] sm:$0xff]
        %v392 = vld [vmem:[%s4 + $0x120] sm:$0xff]
        %v393 = vld [vmem:[%s4 + $0x128] sm:$0xf]
        %v394 = vld [vmem:[%s5] sm:$0xff]
        %v395 = vld [vmem:[%s5 + $0x8] sm:$0xff]
        %v398 = vlaneseq
        %v399 = vshrl.u32 %v398, 7
        %v400 = vsub.s32 0, %v399
        %v401 = vrot.slane %v394, %v400
        %v402 = vlaneseq
        %v403 = vshrl.u32 %v402, 7
        %v404 = vsub.s32 1, %v403
        %v405 = vrot.slane %v394, %v404
        %v406 = vlaneseq
        %v407 = vshrl.u32 %v406, 7
        %v408 = vsub.s32 2, %v407
        %v409 = vrot.slane %v394, %v408
        %v410 = vlaneseq
        %v411 = vshrl.u32 %v410, 7
        %v412 = vsub.s32 3, %v411
        %v413 = vrot.slane %v394, %v412
        %v414 = vlaneseq
        %v415 = vshrl.u32 %v414, 7
        %v416 = vsub.s32 4, %v415
        %v417 = vrot.slane %v394, %v416
        %v418 = vlaneseq
        %v419 = vshrl.u32 %v418, 7
        %v420 = vsub.s32 5, %v419
        %v421 = vrot.slane %v394, %v420
        %v422 = vlaneseq
        %v423 = vshrl.u32 %v422, 7
        %v424 = vsub.s32 6, %v423
        %v425 = vrot.slane %v394, %v424
        %v426 = vlaneseq
        %v427 = vshrl.u32 %v426, 7
        %v428 = vsub.s32 7, %v427
        %v429 = vrot.slane %v394, %v428
        %v430 = vlaneseq
        %v431 = vshrl.u32 %v430, 7
        %v432 = vsub.s32 0, %v431
        %v433 = vrot.slane %v395, %v432
        %v434 = vlaneseq
        %v435 = vshrl.u32 %v434, 7
        %v436 = vsub.s32 1, %v435
        %v437 = vrot.slane %v395, %v436
        %v438 = vlaneseq
        %v439 = vshrl.u32 %v438, 7
        %v440 = vsub.s32 2, %v439
        %v441 = vrot.slane %v395, %v440
        %v442 = vlaneseq
        %v443 = vshrl.u32 %v442, 7
        %v444 = vsub.s32 3, %v443
        %v445 = vrot.slane %v395, %v444
        %v446 = vlaneseq
        %v447 = vshrl.u32 %v446, 7
        %v448 = vsub.s32 4, %v447
        %v449 = vrot.slane %v395, %v448
        %v450 = vlaneseq
        %v451 = vshrl.u32 %v450, 7
        %v452 = vsub.s32 5, %v451
        %v453 = vrot.slane %v395, %v452
        %v454 = vlaneseq
        %v455 = vshrl.u32 %v454, 7
        %v456 = vsub.s32 6, %v455
        %v457 = vrot.slane %v395, %v456
        %v513 = vunpack.c.l.b16 %v354
        %v514 = vunpack.c.h.b16 %v354
        %v515 = vunpack.c.l.b16 %v355
        %v516 = vunpack.c.h.b16 %v355
        %v517 = vunpack.c.l.b16 %v356
        %v518 = vunpack.c.h.b16 %v356
        %v519 = vunpack.c.l.b16 %v357
        %v520 = vunpack.c.h.b16 %v357
        %v521 = vunpack.c.l.b16 %v358
        %v522 = vunpack.c.h.b16 %v358
        %v523 = vunpack.c.l.b16 %v359
        %v524 = vunpack.c.h.b16 %v359
        %v525 = vunpack.c.l.b16 %v360
        %v526 = vunpack.c.h.b16 %v360
        %v527 = vunpack.c.l.b16 %v361
        %v528 = vunpack.c.l.b16 %v362
        %v529 = vunpack.c.h.b16 %v362
        %v530 = vunpack.c.l.b16 %v363
        %v531 = vunpack.c.h.b16 %v363
        %v532 = vunpack.c.l.b16 %v364
        %v533 = vunpack.c.h.b16 %v364
        %v534 = vunpack.c.l.b16 %v365
        %v535 = vunpack.c.h.b16 %v365
        %v536 = vunpack.c.l.b16 %v366
        %v537 = vunpack.c.h.b16 %v366
        %v538 = vunpack.c.l.b16 %v367
        %v539 = vunpack.c.h.b16 %v367
        %v540 = vunpack.c.l.b16 %v368
        %v541 = vunpack.c.h.b16 %v368
        %v542 = vunpack.c.l.b16 %v369
        %v543 = vunpack.c.l.b16 %v370
        %v544 = vunpack.c.h.b16 %v370
        %v545 = vunpack.c.l.b16 %v371
        %v546 = vunpack.c.h.b16 %v371
        %v547 = vunpack.c.l.b16 %v372
        %v548 = vunpack.c.h.b16 %v372
        %v549 = vunpack.c.l.b16 %v373
        %v550 = vunpack.c.h.b16 %v373
        %v551 = vunpack.c.l.b16 %v374
        %v552 = vunpack.c.h.b16 %v374
        %v553 = vunpack.c.l.b16 %v375
        %v554 = vunpack.c.h.b16 %v375
        %v555 = vunpack.c.l.b16 %v376
        %v556 = vunpack.c.h.b16 %v376
        %v557 = vunpack.c.l.b16 %v377
        %v558 = vunpack.c.l.b16 %v378
        %v559 = vunpack.c.h.b16 %v378
        %v560 = vunpack.c.l.b16 %v379
        %v561 = vunpack.c.h.b16 %v379
        %v562 = vunpack.c.l.b16 %v380
        %v563 = vunpack.c.h.b16 %v380
        %v564 = vunpack.c.l.b16 %v381
        %v565 = vunpack.c.h.b16 %v381
        %v566 = vunpack.c.l.b16 %v382
        %v567 = vunpack.c.h.b16 %v382
        %v568 = vunpack.c.l.b16 %v383
        %v569 = vunpack.c.h.b16 %v383
        %v570 = vunpack.c.l.b16 %v384
        %v571 = vunpack.c.h.b16 %v384
        %v572 = vunpack.c.l.b16 %v385
        %v573 = vunpack.c.l.b16 %v386
        %v574 = vunpack.c.h.b16 %v386
        %v575 = vunpack.c.l.b16 %v387
        %v576 = vunpack.c.h.b16 %v387
        %v577 = vunpack.c.l.b16 %v388
        %v578 = vunpack.c.h.b16 %v388
        %v579 = vunpack.c.l.b16 %v389
        %v580 = vunpack.c.h.b16 %v389
        %v581 = vunpack.c.l.b16 %v390
        %v582 = vunpack.c.h.b16 %v390
        %v583 = vunpack.c.l.b16 %v391
        %v584 = vunpack.c.h.b16 %v391
        %v585 = vunpack.c.l.b16 %v392
        %v586 = vunpack.c.h.b16 %v392
        %v587 = vunpack.c.l.b16 %v393
        %v588 = vpack.c.b16 %v528, %v513
        %v589 = vpack.c.b16 %v529, %v514
        %v590 = vpack.c.b16 %v530, %v515
        %v591 = vpack.c.b16 %v531, %v516
        %v592 = vpack.c.b16 %v532, %v517
        %v593 = vpack.c.b16 %v533, %v518
        %v594 = vpack.c.b16 %v534, %v519
        %v595 = vpack.c.b16 %v535, %v520
        %v596 = vpack.c.b16 %v536, %v521
        %v597 = vpack.c.b16 %v537, %v522
        %v598 = vpack.c.b16 %v538, %v523
        %v599 = vpack.c.b16 %v539, %v524
        %v600 = vpack.c.b16 %v540, %v525
        %v601 = vpack.c.b16 %v541, %v526
        %v602 = vpack.c.b16 %v542, %v527
        %v603 = vpack.c.b16 %v558, %v543
        %v604 = vpack.c.b16 %v559, %v544
        %v605 = vpack.c.b16 %v560, %v545
        %v606 = vpack.c.b16 %v561, %v546
        %v607 = vpack.c.b16 %v562, %v547
        %v608 = vpack.c.b16 %v563, %v548
        %v609 = vpack.c.b16 %v564, %v549
        %v610 = vpack.c.b16 %v565, %v550
        %v611 = vpack.c.b16 %v566, %v551
        %v612 = vpack.c.b16 %v567, %v552
        %v613 = vpack.c.b16 %v568, %v553
        %v614 = vpack.c.b16 %v569, %v554
        %v615 = vpack.c.b16 %v570, %v555
        %v616 = vpack.c.b16 %v571, %v556
        %v617 = vpack.c.b16 %v572, %v557
        %v618 = vpack.c.b16 %v573, %v573
        %v619 = vpack.c.b16 %v574, %v574
        %v620 = vpack.c.b16 %v575, %v575
        %v621 = vpack.c.b16 %v576, %v576
        %v622 = vpack.c.b16 %v577, %v577
        %v623 = vpack.c.b16 %v578, %v578
        %v624 = vpack.c.b16 %v579, %v579
        %v625 = vpack.c.b16 %v580, %v580
        %v626 = vpack.c.b16 %v581, %v581
        %v627 = vpack.c.b16 %v582, %v582
        %v628 = vpack.c.b16 %v583, %v583
        %v629 = vpack.c.b16 %v584, %v584
        %v630 = vpack.c.b16 %v585, %v585
        %v631 = vpack.c.b16 %v586, %v586
        %v632 = vpack.c.b16 %v587, %v587
        %v664 = vsel %vm324, %v353, 0
        %vm666 = vcmask 1043456
        %v668 = vsel %vm666, %v618, 0
        %v671 = vsel %vm666, %v619, 0
        %v674 = vsel %vm666, %v620, 0
        %v677 = vsel %vm666, %v621, 0
        %v680 = vsel %vm666, %v622, 0
        %v683 = vsel %vm666, %v623, 0
        %v686 = vsel %vm666, %v624, 0
        %v689 = vsel %vm666, %v625, 0
        %v692 = vsel %vm666, %v626, 0
        %v695 = vsel %vm666, %v627, 0
        %v698 = vsel %vm666, %v628, 0
        %v701 = vsel %vm666, %v629, 0
        %v704 = vsel %vm666, %v630, 0
        %v707 = vsel %vm666, %v631, 0
        %v710 = vsel %vm666, %v632, 0
        %712 = vmatprep.subr.bf16.mxu0 %v589
        %713 = vmatpush1.bf16.msra.mxu0 %v588
        %714 = vmatprep.subr.bf16.mxu0 %v604
        %715 = vmatpush1.bf16.msra.mxu0 %v603
        %716 = vmatprep.subr.bf16.mxu0 %v671
        %717 = vmatpush1.bf16.msra.mxu0 %v668
        %718 = vmatprep.subr.bf16.mxu0 0
        %719 = vmatpush1.bf16.msra.mxu0 0
        %720 = vmatprep.subr.bf16.mxu0 0
        %721 = vmatpush1.bf16.msra.mxu0 0
        %722 = vmatprep.subr.bf16.mxu0 0
        %723 = vmatpush1.bf16.msra.mxu0 0
        %724 = vmatprep.subr.bf16.mxu0 0
        %725 = vmatpush1.bf16.msra.mxu0 0
        %726 = vmatprep.subr.bf16.mxu0 0
        %727 = vmatpush1.bf16.msra.mxu0 0
        %728 = vmatprep.subr.bf16.mxu0 0
        %729 = vmatpush1.bf16.msra.mxu0 0
        %730 = vmatprep.subr.bf16.mxu0 0
        %731 = vmatpush1.bf16.msra.mxu0 0
        %732 = vmatprep.subr.bf16.mxu0 0
        %733 = vmatpush1.bf16.msra.mxu0 0
        %734 = vmatprep.subr.bf16.mxu0 0
        %735 = vmatpush1.bf16.msra.mxu0 0
        %736 = vmatprep.subr.bf16.mxu0 0
        %737 = vmatpush1.bf16.msra.mxu0 0
        %738 = vmatprep.subr.bf16.mxu0 0
        %739 = vmatpush1.bf16.msra.mxu0 0
        %740 = vmatprep.subr.bf16.mxu0 0
        %741 = vmatpush1.bf16.msra.mxu0 0
        %742 = vmatprep.subr.bf16.mxu0 0
        %743 = vmatpush1.bf16.msra.mxu0 0
        %744 = vmatprep.mubr.bf16.mxu0 0
        %745 = vmatmul.mubr.bf16.gmra.mrb[0].mxu0 %v664
        %v746 = vpop.f32.mrb[0].mxu0
        %v747 = vadd.f32 %v401, %v746
        %v748 = vpop.f32.mrb[0].mxu0
        %v749 = vadd.f32 %v405, %v748
        %v750 = vpop.f32.mrb[0].mxu0
        %v751 = vpop.f32.mrb[0].mxu0
        %752 = vdwg.mxu0
        %753 = vmatprep.subr.bf16.mxu0 %v591
        %754 = vmatpush1.bf16.msra.mxu0 %v590
        %755 = vmatprep.subr.bf16.mxu0 %v606
        %756 = vmatpush1.bf16.msra.mxu0 %v605
        %757 = vmatprep.subr.bf16.mxu0 %v677
        %758 = vmatpush1.bf16.msra.mxu0 %v674
        %759 = vmatprep.subr.bf16.mxu0 0
        %760 = vmatpush1.bf16.msra.mxu0 0
        %761 = vmatprep.subr.bf16.mxu0 0
        %762 = vmatpush1.bf16.msra.mxu0 0
        %763 = vmatprep.subr.bf16.mxu0 0
        %764 = vmatpush1.bf16.msra.mxu0 0
        %765 = vmatprep.subr.bf16.mxu0 0
        %766 = vmatpush1.bf16.msra.mxu0 0
        %767 = vmatprep.subr.bf16.mxu0 0
        %768 = vmatpush1.bf16.msra.mxu0 0
        %769 = vmatprep.subr.bf16.mxu0 0
        %770 = vmatpush1.bf16.msra.mxu0 0
        %771 = vmatprep.subr.bf16.mxu0 0
        %772 = vmatpush1.bf16.msra.mxu0 0
        %773 = vmatprep.subr.bf16.mxu0 0
        %774 = vmatpush1.bf16.msra.mxu0 0
        %775 = vmatprep.subr.bf16.mxu0 0
        %776 = vmatpush1.bf16.msra.mxu0 0
        %777 = vmatprep.subr.bf16.mxu0 0
        %778 = vmatpush1.bf16.msra.mxu0 0
        %779 = vmatprep.subr.bf16.mxu0 0
        %780 = vmatpush1.bf16.msra.mxu0 0
        %781 = vmatprep.subr.bf16.mxu0 0
        %782 = vmatpush1.bf16.msra.mxu0 0
        %783 = vmatprep.subr.bf16.mxu0 0
        %784 = vmatpush1.bf16.msra.mxu0 0
        %785 = vmatprep.mubr.bf16.mxu0 0
        %786 = vmatmul.mubr.bf16.gmra.mrb[0].mxu0 %v664
        %v787 = vpop.f32.mrb[0].mxu0
        %v788 = vadd.f32 %v409, %v787
        %v789 = vpop.f32.mrb[0].mxu0
        %v790 = vadd.f32 %v413, %v789
        %v791 = vpop.f32.mrb[0].mxu0
        %v792 = vpop.f32.mrb[0].mxu0
        %793 = vdwg.mxu0
        %794 = vmatprep.subr.bf16.mxu0 %v593
        %795 = vmatpush1.bf16.msra.mxu0 %v592
        %796 = vmatprep.subr.bf16.mxu0 %v608
        %797 = vmatpush1.bf16.msra.mxu0 %v607
        %798 = vmatprep.subr.bf16.mxu0 %v683
        %799 = vmatpush1.bf16.msra.mxu0 %v680
        %800 = vmatprep.subr.bf16.mxu0 0
        %801 = vmatpush1.bf16.msra.mxu0 0
        %802 = vmatprep.subr.bf16.mxu0 0
        %803 = vmatpush1.bf16.msra.mxu0 0
        %804 = vmatprep.subr.bf16.mxu0 0
        %805 = vmatpush1.bf16.msra.mxu0 0
        %806 = vmatprep.subr.bf16.mxu0 0
        %807 = vmatpush1.bf16.msra.mxu0 0
        %808 = vmatprep.subr.bf16.mxu0 0
        %809 = vmatpush1.bf16.msra.mxu0 0
        %810 = vmatprep.subr.bf16.mxu0 0
        %811 = vmatpush1.bf16.msra.mxu0 0
        %812 = vmatprep.subr.bf16.mxu0 0
        %813 = vmatpush1.bf16.msra.mxu0 0
        %814 = vmatprep.subr.bf16.mxu0 0
        %815 = vmatpush1.bf16.msra.mxu0 0
        %816 = vmatprep.subr.bf16.mxu0 0
        %817 = vmatpush1.bf16.msra.mxu0 0
        %818 = vmatprep.subr.bf16.mxu0 0
        %819 = vmatpush1.bf16.msra.mxu0 0
        %820 = vmatprep.subr.bf16.mxu0 0
        %821 = vmatpush1.bf16.msra.mxu0 0
        %822 = vmatprep.subr.bf16.mxu0 0
        %823 = vmatpush1.bf16.msra.mxu0 0
        %824 = vmatprep.subr.bf16.mxu0 0
        %825 = vmatpush1.bf16.msra.mxu0 0
        %826 = vmatprep.mubr.bf16.mxu0 0
        %827 = vmatmul.mubr.bf16.gmra.mrb[0].mxu0 %v664
        %v828 = vpop.f32.mrb[0].mxu0
        %v829 = vadd.f32 %v417, %v828
        %v830 = vpop.f32.mrb[0].mxu0
        %v831 = vadd.f32 %v421, %v830
        %v832 = vpop.f32.mrb[0].mxu0
        %v833 = vpop.f32.mrb[0].mxu0
        %834 = vdwg.mxu0
        %835 = vmatprep.subr.bf16.mxu0 %v595
        %836 = vmatpush1.bf16.msra.mxu0 %v594
        %837 = vmatprep.subr.bf16.mxu0 %v610
        %838 = vmatpush1.bf16.msra.mxu0 %v609
        %839 = vmatprep.subr.bf16.mxu0 %v689
        %840 = vmatpush1.bf16.msra.mxu0 %v686
        %841 = vmatprep.subr.bf16.mxu0 0
        %842 = vmatpush1.bf16.msra.mxu0 0
        %843 = vmatprep.subr.bf16.mxu0 0
        %844 = vmatpush1.bf16.msra.mxu0 0
        %845 = vmatprep.subr.bf16.mxu0 0
        %846 = vmatpush1.bf16.msra.mxu0 0
        %847 = vmatprep.subr.bf16.mxu0 0
        %848 = vmatpush1.bf16.msra.mxu0 0
        %849 = vmatprep.subr.bf16.mxu0 0
        %850 = vmatpush1.bf16.msra.mxu0 0
        %851 = vmatprep.subr.bf16.mxu0 0
        %852 = vmatpush1.bf16.msra.mxu0 0
        %853 = vmatprep.subr.bf16.mxu0 0
        %854 = vmatpush1.bf16.msra.mxu0 0
        %855 = vmatprep.subr.bf16.mxu0 0
        %856 = vmatpush1.bf16.msra.mxu0 0
        %857 = vmatprep.subr.bf16.mxu0 0
        %858 = vmatpush1.bf16.msra.mxu0 0
        %859 = vmatprep.subr.bf16.mxu0 0
        %860 = vmatpush1.bf16.msra.mxu0 0
        %861 = vmatprep.subr.bf16.mxu0 0
        %862 = vmatpush1.bf16.msra.mxu0 0
        %863 = vmatprep.subr.bf16.mxu0 0
        %864 = vmatpush1.bf16.msra.mxu0 0
        %865 = vmatprep.subr.bf16.mxu0 0
        %866 = vmatpush1.bf16.msra.mxu0 0
        %867 = vmatprep.mubr.bf16.mxu0 0
        %868 = vmatmul.mubr.bf16.gmra.mrb[0].mxu0 %v664
        %v869 = vpop.f32.mrb[0].mxu0
        %v870 = vadd.f32 %v425, %v869
        %v871 = vpop.f32.mrb[0].mxu0
        %v872 = vadd.f32 %v429, %v871
        %v873 = vpop.f32.mrb[0].mxu0
        %v874 = vpop.f32.mrb[0].mxu0
        %875 = vdwg.mxu0
        %876 = vmatprep.subr.bf16.mxu0 %v597
        %877 = vmatpush1.bf16.msra.mxu0 %v596
        %878 = vmatprep.subr.bf16.mxu0 %v612
        %879 = vmatpush1.bf16.msra.mxu0 %v611
        %880 = vmatprep.subr.bf16.mxu0 %v695
        %881 = vmatpush1.bf16.msra.mxu0 %v692
        %882 = vmatprep.subr.bf16.mxu0 0
        %883 = vmatpush1.bf16.msra.mxu0 0
        %884 = vmatprep.subr.bf16.mxu0 0
        %885 = vmatpush1.bf16.msra.mxu0 0
        %886 = vmatprep.subr.bf16.mxu0 0
        %887 = vmatpush1.bf16.msra.mxu0 0
        %888 = vmatprep.subr.bf16.mxu0 0
        %889 = vmatpush1.bf16.msra.mxu0 0
        %890 = vmatprep.subr.bf16.mxu0 0
        %891 = vmatpush1.bf16.msra.mxu0 0
        %892 = vmatprep.subr.bf16.mxu0 0
        %893 = vmatpush1.bf16.msra.mxu0 0
        %894 = vmatprep.subr.bf16.mxu0 0
        %895 = vmatpush1.bf16.msra.mxu0 0
        %896 = vmatprep.subr.bf16.mxu0 0
        %897 = vmatpush1.bf16.msra.mxu0 0
        %898 = vmatprep.subr.bf16.mxu0 0
        %899 = vmatpush1.bf16.msra.mxu0 0
        %900 = vmatprep.subr.bf16.mxu0 0
        %901 = vmatpush1.bf16.msra.mxu0 0
        %902 = vmatprep.subr.bf16.mxu0 0
        %903 = vmatpush1.bf16.msra.mxu0 0
        %904 = vmatprep.subr.bf16.mxu0 0
        %905 = vmatpush1.bf16.msra.mxu0 0
        %906 = vmatprep.subr.bf16.mxu0 0
        %907 = vmatpush1.bf16.msra.mxu0 0
        %908 = vmatprep.mubr.bf16.mxu0 0
        %909 = vmatmul.mubr.bf16.gmra.mrb[0].mxu0 %v664
        %v910 = vpop.f32.mrb[0].mxu0
        %v911 = vadd.f32 %v433, %v910
        %v912 = vpop.f32.mrb[0].mxu0
        %v913 = vadd.f32 %v437, %v912
        %v914 = vpop.f32.mrb[0].mxu0
        %v915 = vpop.f32.mrb[0].mxu0
        %916 = vdwg.mxu0
        %917 = vmatprep.subr.bf16.mxu0 %v599
        %918 = vmatpush1.bf16.msra.mxu0 %v598
        %919 = vmatprep.subr.bf16.mxu0 %v614
        %920 = vmatpush1.bf16.msra.mxu0 %v613
        %921 = vmatprep.subr.bf16.mxu0 %v701
        %922 = vmatpush1.bf16.msra.mxu0 %v698
        %923 = vmatprep.subr.bf16.mxu0 0
        %924 = vmatpush1.bf16.msra.mxu0 0
        %925 = vmatprep.subr.bf16.mxu0 0
        %926 = vmatpush1.bf16.msra.mxu0 0
        %927 = vmatprep.subr.bf16.mxu0 0
        %928 = vmatpush1.bf16.msra.mxu0 0
        %929 = vmatprep.subr.bf16.mxu0 0
        %930 = vmatpush1.bf16.msra.mxu0 0
        %931 = vmatprep.subr.bf16.mxu0 0
        %932 = vmatpush1.bf16.msra.mxu0 0
        %933 = vmatprep.subr.bf16.mxu0 0
        %934 = vmatpush1.bf16.msra.mxu0 0
        %935 = vmatprep.subr.bf16.mxu0 0
        %936 = vmatpush1.bf16.msra.mxu0 0
        %937 = vmatprep.subr.bf16.mxu0 0
        %938 = vmatpush1.bf16.msra.mxu0 0
        %939 = vmatprep.subr.bf16.mxu0 0
        %940 = vmatpush1.bf16.msra.mxu0 0
        %941 = vmatprep.subr.bf16.mxu0 0
        %942 = vmatpush1.bf16.msra.mxu0 0
        %943 = vmatprep.subr.bf16.mxu0 0
        %944 = vmatpush1.bf16.msra.mxu0 0
        %945 = vmatprep.subr.bf16.mxu0 0
        %946 = vmatpush1.bf16.msra.mxu0 0
        %947 = vmatprep.subr.bf16.mxu0 0
        %948 = vmatpush1.bf16.msra.mxu0 0
        %949 = vmatprep.mubr.bf16.mxu0 0
        %950 = vmatmul.mubr.bf16.gmra.mrb[0].mxu0 %v664
        %v951 = vpop.f32.mrb[0].mxu0
        %v952 = vadd.f32 %v441, %v951
        %v953 = vpop.f32.mrb[0].mxu0
        %v954 = vadd.f32 %v445, %v953
        %v955 = vpop.f32.mrb[0].mxu0
        %v956 = vpop.f32.mrb[0].mxu0
        %957 = vdwg.mxu0
        %958 = vmatprep.subr.bf16.mxu0 %v601
        %959 = vmatpush1.bf16.msra.mxu0 %v600
        %960 = vmatprep.subr.bf16.mxu0 %v616
        %961 = vmatpush1.bf16.msra.mxu0 %v615
        %962 = vmatprep.subr.bf16.mxu0 %v707
        %963 = vmatpush1.bf16.msra.mxu0 %v704
        %964 = vmatprep.subr.bf16.mxu0 0
        %965 = vmatpush1.bf16.msra.mxu0 0
        %966 = vmatprep.subr.bf16.mxu0 0
        %967 = vmatpush1.bf16.msra.mxu0 0
        %968 = vmatprep.subr.bf16.mxu0 0
        %969 = vmatpush1.bf16.msra.mxu0 0
        %970 = vmatprep.subr.bf16.mxu0 0
        %971 = vmatpush1.bf16.msra.mxu0 0
        %972 = vmatprep.subr.bf16.mxu0 0
        %973 = vmatpush1.bf16.msra.mxu0 0
        %974 = vmatprep.subr.bf16.mxu0 0
        %975 = vmatpush1.bf16.msra.mxu0 0
        %976 = vmatprep.subr.bf16.mxu0 0
        %977 = vmatpush1.bf16.msra.mxu0 0
        %978 = vmatprep.subr.bf16.mxu0 0
        %979 = vmatpush1.bf16.msra.mxu0 0
        %980 = vmatprep.subr.bf16.mxu0 0
        %981 = vmatpush1.bf16.msra.mxu0 0
        %982 = vmatprep.subr.bf16.mxu0 0
        %983 = vmatpush1.bf16.msra.mxu0 0
        %984 = vmatprep.subr.bf16.mxu0 0
        %985 = vmatpush1.bf16.msra.mxu0 0
        %986 = vmatprep.subr.bf16.mxu0 0
        %987 = vmatpush1.bf16.msra.mxu0 0
        %988 = vmatprep.subr.bf16.mxu0 0
        %989 = vmatpush1.bf16.msra.mxu0 0
        %990 = vmatprep.mubr.bf16.mxu0 0
        %991 = vmatmul.mubr.bf16.gmra.mrb[0].mxu0 %v664
        %v992 = vpop.f32.mrb[0].mxu0
        %v993 = vadd.f32 %v449, %v992
        %v994 = vpop.f32.mrb[0].mxu0
        %v995 = vadd.f32 %v453, %v994
        %v996 = vpop.f32.mrb[0].mxu0
        %v997 = vpop.f32.mrb[0].mxu0
        %998 = vdwg.mxu0
        %999 = vmatprep.subr.bf16.mxu0 0
        %1000 = vmatpush1.bf16.msra.mxu0 %v602
        %1001 = vmatprep.subr.bf16.mxu0 0
        %1002 = vmatpush1.bf16.msra.mxu0 %v617
        %1003 = vmatprep.subr.bf16.mxu0 0
        %1004 = vmatpush1.bf16.msra.mxu0 %v710
        %1005 = vmatprep.subr.bf16.mxu0 0
        %1006 = vmatpush1.bf16.msra.mxu0 0
        %1007 = vmatprep.subr.bf16.mxu0 0
        %1008 = vmatpush1.bf16.msra.mxu0 0
        %1009 = vmatprep.subr.bf16.mxu0 0
        %1010 = vmatpush1.bf16.msra.mxu0 0
        %1011 = vmatprep.subr.bf16.mxu0 0
        %1012 = vmatpush1.bf16.msra.mxu0 0
        %1013 = vmatprep.subr.bf16.mxu0 0
        %1014 = vmatpush1.bf16.msra.mxu0 0
        %1015 = vmatprep.subr.bf16.mxu0 0
        %1016 = vmatpush1.bf16.msra.mxu0 0
        %1017 = vmatprep.subr.bf16.mxu0 0
        %1018 = vmatpush1.bf16.msra.mxu0 0
        %1019 = vmatprep.subr.bf16.mxu0 0
        %1020 = vmatpush1.bf16.msra.mxu0 0
        %1021 = vmatprep.subr.bf16.mxu0 0
        %1022 = vmatpush1.bf16.msra.mxu0 0
        %1023 = vmatprep.subr.bf16.mxu0 0
        %1024 = vmatpush1.bf16.msra.mxu0 0
        %1025 = vmatprep.subr.bf16.mxu0 0
        %1026 = vmatpush1.bf16.msra.mxu0 0
        %1027 = vmatprep.subr.bf16.mxu0 0
        %1028 = vmatpush1.bf16.msra.mxu0 0
        %1029 = vmatprep.subr.bf16.mxu0 0
        %1030 = vmatpush1.bf16.msra.mxu0 0
        %1031 = vmatprep.mubr.bf16.mxu0 0
        %1032 = vmatmul.mubr.bf16.gmra.mrb[0].mxu0 %v664
        %v1033 = vpop.f32.mrb[0].mxu0
        %v1034 = vadd.f32 %v457, %v1033
        %v1035 = vpop.f32.mrb[0].mxu0
        %v1036 = vpop.f32.mrb[0].mxu0
        %v1037 = vpop.f32.mrb[0].mxu0
        %1038 = vdwg.mxu0
        %v1039 = vlaneseq
        %v1040 = vand.u32 %v1039, 127
        %v1041 = vstv %s320
        %vm1042 = vcmp.lt.s32.totalorder %v1040, %v1041
        %v1043 = vpack.c.bf16 %v747, %v747
        %v1044 = vpack.c.bf16 %v831, %v831
        %v1045 = vpack.c.bf16 %v952, %v952
        %1046 = vmatprep.subr.bf16.mxu0 0
        %1047 = vmatpush1.bf16.xpose.msra.mxu0 %v1044
        %1048 = vmatprep.subr.bf16.mxu0 0
        %1049 = vmatpush1.bf16.xpose.msra.mxu0 0
        %1050 = vmatprep.subr.bf16.mxu0 0
        %1051 = vmatpush1.bf16.xpose.msra.mxu0 0
        %1052 = vmatprep.subr.bf16.mxu0 0
        %1053 = vmatpush1.bf16.xpose.msra.mxu0 0
        %1054 = vmatprep.subr.bf16.mxu0 0
        %1055 = vmatpush1.bf16.xpose.msra.mxu0 0
        %1056 = vmatprep.subr.bf16.mxu0 0
        %1057 = vmatpush1.bf16.xpose.msra.mxu0 0
        %1058 = vmatprep.subr.bf16.mxu0 0
        %1059 = vmatpush1.bf16.xpose.msra.mxu0 0
        %1060 = vmatprep.subr.bf16.mxu0 0
        %1061 = vmatpush1.bf16.xpose.msra.mxu0 0
        %1062 = vmatprep.subr.bf16.mxu0 0
        %1063 = vmatpush1.bf16.xpose.msra.mxu0 0
        %1064 = vmatprep.subr.bf16.mxu0 0
        %1065 = vmatpush1.bf16.xpose.msra.mxu0 0
        %1066 = vmatprep.subr.bf16.mxu0 0
        %1067 = vmatpush1.bf16.xpose.msra.mxu0 0
        %1068 = vmatprep.subr.bf16.mxu0 0
        %1069 = vmatpush1.bf16.xpose.msra.mxu0 0
        %1070 = vmatprep.subr.bf16.mxu0 0
        %1071 = vmatpush1.bf16.xpose.msra.mxu0 0
        %1072 = vmatprep.subr.bf16.mxu0 0
        %1073 = vmatpush1.bf16.xpose.msra.mxu0 0
        %1074 = vmatprep.subr.bf16.mxu0 0
        %1075 = vmatpush1.bf16.xpose.msra.mxu0 0
        %1076 = vmatprep.subr.bf16.mxu0 0
        %1077 = vmatpush1.bf16.xpose.msra.mxu0 0
        %1078 = vmatprep.mubr.bf16.mxu0 0
        %1079 = vmatmul.mubr.bf16.gmra.mrb[0].mxu0 %v1043
        %v1080 = vpop.f32.mrb[0].mxu0
        %v1081 = vadd.f32 0.0, %v1080
        %v1082 = vpop.f32.mrb[0].mxu0
        %v1083 = vpop.f32.mrb[0].mxu0
        %v1084 = vpop.f32.mrb[0].mxu0
        %1085 = vdwg.mxu0
        %v1086 = vmul.f32 %v1081, 0.35355338
        %v1087 = vsel %vm1042, 1, 0
        %vm1088 = vcmp.eq.s32.totalorder %v1087, 1
        %v1089 = vsel %vm1088, %v1086, -1e+09
        %vm1090 = vcmask 64512
        %v1091 = vsel %vm1090, %v1089, -inf
        %1092 = vmax.xlane.f32.xlu0 %v1091
        %v1093 = vpop.xlane.xlu0 %1092
        %v1094 = vsub.f32 %v1089, %v1093
        %v1095 = vmul.f32 %v1094, 1.442695
        %v1096 = vpow.pop %v1095
        %v1097 = vsel %vm1090, %v1096, 0.0
        %1098 = vadd.xlane.f32.xlu0 %v1097
        %v1099 = vpop.xlane.xlu0 %1098
        %v1100 = vrcp.pop %v1099
        %v1101 = vmul.f32 %v1096, %v1100
        %1102 = vst.msk [vmem:[%s314] sm:$0xff] %vm1090, %v1101
        %v1103 = vpack.c.bf16 %v1101, %v1101
        %v1105 = vsel %vm1090, %v1103, 0
        %v1108 = vsel %vm666, %v1045, 0
        %1110 = vmatprep.subr.bf16.mxu0 0
        %1111 = vmatpush1.bf16.msra.mxu0 %v1108
        %1112 = vmatprep.subr.bf16.mxu0 0
        %1113 = vmatpush1.bf16.msra.mxu0 0
        %1114 = vmatprep.subr.bf16.mxu0 0
        %1115 = vmatpush1.bf16.msra.mxu0 0
        %1116 = vmatprep.subr.bf16.mxu0 0
        %1117 = vmatpush1.bf16.msra.mxu0 0
        %1118 = vmatprep.subr.bf16.mxu0 0
        %1119 = vmatpush1.bf16.msra.mxu0 0
        %1120 = vmatprep.subr.bf16.mxu0 0
        %1121 = vmatpush1.bf16.msra.mxu0 0
        %1122 = vmatprep.subr.bf16.mxu0 0
        %1123 = vmatpush1.bf16.msra.mxu0 0
        %1124 = vmatprep.subr.bf16.mxu0 0
        %1125 = vmatpush1.bf16.msra.mxu0 0
        %1126 = vmatprep.subr.bf16.mxu0 0
        %1127 = vmatpush1.bf16.msra.mxu0 0
        %1128 = vmatprep.subr.bf16.mxu0 0
        %1129 = vmatpush1.bf16.msra.mxu0 0
        %1130 = vmatprep.subr.bf16.mxu0 0
        %1131 = vmatpush1.bf16.msra.mxu0 0
        %1132 = vmatprep.subr.bf16.mxu0 0
        %1133 = vmatpush1.bf16.msra.mxu0 0
        %1134 = vmatprep.subr.bf16.mxu0 0
        %1135 = vmatpush1.bf16.msra.mxu0 0
        %1136 = vmatprep.subr.bf16.mxu0 0
        %1137 = vmatpush1.bf16.msra.mxu0 0
        %1138 = vmatprep.subr.bf16.mxu0 0
        %1139 = vmatpush1.bf16.msra.mxu0 0
        %1140 = vmatprep.subr.bf16.mxu0 0
        %1141 = vmatpush1.bf16.msra.mxu0 0
        %1142 = vmatprep.mubr.bf16.mxu0 0
        %1143 = vmatmul.mubr.bf16.gmra.mrb[0].mxu0 %v1105
        %v1144 = vpop.f32.mrb[0].mxu0
        %v1145 = vadd.f32 0.0, %v1144
        %v1146 = vpop.f32.mrb[0].mxu0
        %v1147 = vpop.f32.mrb[0].mxu0
        %v1148 = vpop.f32.mrb[0].mxu0
        %1149 = vdwg.mxu0
        %v1150 = vpack.c.bf16 %v1145, %v1145
        %v1151 = vld [vmem:[%s6] sm:$0xf]
        %v1152 = vld [vmem:[%s6 + $0x4] sm:$0xf]
        %v1153 = vld [vmem:[%s6 + $0x8] sm:$0xf]
        %v1154 = vld [vmem:[%s6 + $0xc] sm:$0xf]
        %v1155 = vld [vmem:[%s6 + $0x10] sm:$0xf]
        %v1156 = vld [vmem:[%s6 + $0x14] sm:$0xf]
        %v1157 = vld [vmem:[%s6 + $0x18] sm:$0xf]
        %v1158 = vld [vmem:[%s6 + $0x1c] sm:$0xf]
        %v1159 = vld [vmem:[%s6 + $0x20] sm:$0xf]
        %v1160 = vld [vmem:[%s6 + $0x24] sm:$0xf]
        %v1161 = vld [vmem:[%s6 + $0x28] sm:$0xf]
        %v1162 = vld [vmem:[%s6 + $0x2c] sm:$0xf]
        %v1163 = vld [vmem:[%s6 + $0x30] sm:$0xf]
        %v1164 = vld [vmem:[%s6 + $0x34] sm:$0xf]
        %v1165 = vld [vmem:[%s6 + $0x38] sm:$0xf]
        %v1166 = vld [vmem:[%s6 + $0x3c] sm:$0xf]
        %v1167 = vpack.c.bf16 %v749, %v749
        %v1168 = vpack.c.bf16 %v870, %v870
        %v1169 = vpack.c.bf16 %v954, %v954
        %1170 = vmatprep.subr.bf16.mxu0 0
        %1171 = vmatpush1.bf16.xpose.msra.mxu0 %v1168
        %1172 = vmatprep.subr.bf16.mxu0 0
        %1173 = vmatpush1.bf16.xpose.msra.mxu0 0
        %1174 = vmatprep.subr.bf16.mxu0 0
        %1175 = vmatpush1.bf16.xpose.msra.mxu0 0
        %1176 = vmatprep.subr.bf16.mxu0 0
        %1177 = vmatpush1.bf16.xpose.msra.mxu0 0
        %1178 = vmatprep.subr.bf16.mxu0 0
        %1179 = vmatpush1.bf16.xpose.msra.mxu0 0
        %1180 = vmatprep.subr.bf16.mxu0 0
        %1181 = vmatpush1.bf16.xpose.msra.mxu0 0
        %1182 = vmatprep.subr.bf16.mxu0 0
        %1183 = vmatpush1.bf16.xpose.msra.mxu0 0
        %1184 = vmatprep.subr.bf16.mxu0 0
        %1185 = vmatpush1.bf16.xpose.msra.mxu0 0
        %1186 = vmatprep.subr.bf16.mxu0 0
        %1187 = vmatpush1.bf16.xpose.msra.mxu0 0
        %1188 = vmatprep.subr.bf16.mxu0 0
        %1189 = vmatpush1.bf16.xpose.msra.mxu0 0
        %1190 = vmatprep.subr.bf16.mxu0 0
        %1191 = vmatpush1.bf16.xpose.msra.mxu0 0
        %1192 = vmatprep.subr.bf16.mxu0 0
        %1193 = vmatpush1.bf16.xpose.msra.mxu0 0
        %1194 = vmatprep.subr.bf16.mxu0 0
        %1195 = vmatpush1.bf16.xpose.msra.mxu0 0
        %1196 = vmatprep.subr.bf16.mxu0 0
        %1197 = vmatpush1.bf16.xpose.msra.mxu0 0
        %1198 = vmatprep.subr.bf16.mxu0 0
        %1199 = vmatpush1.bf16.xpose.msra.mxu0 0
        %1200 = vmatprep.subr.bf16.mxu0 0
        %1201 = vmatpush1.bf16.xpose.msra.mxu0 0
        %1202 = vmatprep.mubr.bf16.mxu0 0
        %1203 = vmatmul.mubr.bf16.gmra.mrb[0].mxu0 %v1167
        %v1204 = vpop.f32.mrb[0].mxu0
        %v1205 = vadd.f32 0.0, %v1204
        %v1206 = vpop.f32.mrb[0].mxu0
        %v1207 = vpop.f32.mrb[0].mxu0
        %v1208 = vpop.f32.mrb[0].mxu0
        %1209 = vdwg.mxu0
        %v1210 = vmul.f32 %v1205, 0.35355338
        %v1211 = vsel %vm1088, %v1210, -1e+09
        %v1212 = vsel %vm1090, %v1211, -inf
        %1213 = vmax.xlane.f32.xlu0 %v1212
        %v1214 = vpop.xlane.xlu0 %1213
        %v1215 = vsub.f32 %v1211, %v1214
        %v1216 = vmul.f32 %v1215, 1.442695
        %v1217 = vpow.pop %v1216
        %v1218 = vsel %vm1090, %v1217, 0.0
        %1219 = vadd.xlane.f32.xlu0 %v1218
        %v1220 = vpop.xlane.xlu0 %1219
        %v1221 = vrcp.pop %v1220
        %v1222 = vmul.f32 %v1217, %v1221
        %s1223 = scalar_lea.vmem %s314, 8 [#allocation6]
        %1224 = vst.msk [vmem:[%s1223] sm:$0xff] %vm1090, %v1222
        %v1225 = vpack.c.bf16 %v1222, %v1222
        %v1227 = vsel %vm1090, %v1225, 0
        %v1230 = vsel %vm666, %v1169, 0
        %1232 = vmatprep.subr.bf16.mxu0 0
        %1233 = vmatpush1.bf16.msra.mxu0 %v1230
        %1234 = vmatprep.subr.bf16.mxu0 0
        %1235 = vmatpush1.bf16.msra.mxu0 0
        %1236 = vmatprep.subr.bf16.mxu0 0
        %1237 = vmatpush1.bf16.msra.mxu0 0
        %1238 = vmatprep.subr.bf16.mxu0 0
        %1239 = vmatpush1.bf16.msra.mxu0 0
        %1240 = vmatprep.subr.bf16.mxu0 0
        %1241 = vmatpush1.bf16.msra.mxu0 0
        %1242 = vmatprep.subr.bf16.mxu0 0
        %1243 = vmatpush1.bf16.msra.mxu0 0
        %1244 = vmatprep.subr.bf16.mxu0 0
        %1245 = vmatpush1.bf16.msra.mxu0 0
        %1246 = vmatprep.subr.bf16.mxu0 0
        %1247 = vmatpush1.bf16.msra.mxu0 0
        %1248 = vmatprep.subr.bf16.mxu0 0
        %1249 = vmatpush1.bf16.msra.mxu0 0
        %1250 = vmatprep.subr.bf16.mxu0 0
        %1251 = vmatpush1.bf16.msra.mxu0 0
        %1252 = vmatprep.subr.bf16.mxu0 0
        %1253 = vmatpush1.bf16.msra.mxu0 0
        %1254 = vmatprep.subr.bf16.mxu0 0
        %1255 = vmatpush1.bf16.msra.mxu0 0
        %1256 = vmatprep.subr.bf16.mxu0 0
        %1257 = vmatpush1.bf16.msra.mxu0 0
        %1258 = vmatprep.subr.bf16.mxu0 0
        %1259 = vmatpush1.bf16.msra.mxu0 0
        %1260 = vmatprep.subr.bf16.mxu0 0
        %1261 = vmatpush1.bf16.msra.mxu0 0
        %1262 = vmatprep.subr.bf16.mxu0 0
        %1263 = vmatpush1.bf16.msra.mxu0 0
        %1264 = vmatprep.mubr.bf16.mxu0 0
        %1265 = vmatmul.mubr.bf16.gmra.mrb[0].mxu0 %v1227
        %v1266 = vpop.f32.mrb[0].mxu0
        %v1267 = vadd.f32 0.0, %v1266
        %v1268 = vpop.f32.mrb[0].mxu0
        %v1269 = vpop.f32.mrb[0].mxu0
        %v1270 = vpop.f32.mrb[0].mxu0
        %1271 = vdwg.mxu0
        %v1272 = vpack.c.bf16 %v1267, %v1267
        %v1273 = vld [vmem:[%s6 + $0x40] sm:$0xf]
        %v1274 = vld [vmem:[%s6 + $0x44] sm:$0xf]
        %v1275 = vld [vmem:[%s6 + $0x48] sm:$0xf]
        %v1276 = vld [vmem:[%s6 + $0x4c] sm:$0xf]
        %v1277 = vld [vmem:[%s6 + $0x50] sm:$0xf]
        %v1278 = vld [vmem:[%s6 + $0x54] sm:$0xf]
        %v1279 = vld [vmem:[%s6 + $0x58] sm:$0xf]
        %v1280 = vld [vmem:[%s6 + $0x5c] sm:$0xf]
        %v1281 = vld [vmem:[%s6 + $0x60] sm:$0xf]
        %v1282 = vld [vmem:[%s6 + $0x64] sm:$0xf]
        %v1283 = vld [vmem:[%s6 + $0x68] sm:$0xf]
        %v1284 = vld [vmem:[%s6 + $0x6c] sm:$0xf]
        %v1285 = vld [vmem:[%s6 + $0x70] sm:$0xf]
        %v1286 = vld [vmem:[%s6 + $0x74] sm:$0xf]
        %v1287 = vld [vmem:[%s6 + $0x78] sm:$0xf]
        %v1288 = vld [vmem:[%s6 + $0x7c] sm:$0xf]
        %v1305 = vunpack.c.l.b16 %v1273
        %v1306 = vunpack.c.l.b16 %v1274
        %v1307 = vunpack.c.l.b16 %v1275
        %v1308 = vunpack.c.l.b16 %v1276
        %v1309 = vunpack.c.l.b16 %v1277
        %v1310 = vunpack.c.l.b16 %v1278
        %v1311 = vunpack.c.l.b16 %v1279
        %v1312 = vunpack.c.l.b16 %v1280
        %v1313 = vunpack.c.l.b16 %v1281
        %v1314 = vunpack.c.l.b16 %v1282
        %v1315 = vunpack.c.l.b16 %v1283
        %v1316 = vunpack.c.l.b16 %v1284
        %v1317 = vunpack.c.l.b16 %v1285
        %v1318 = vunpack.c.l.b16 %v1286
        %v1319 = vunpack.c.l.b16 %v1287
        %v1320 = vunpack.c.l.b16 %v1288
        %v1321 = vpack.c.b16 %v1306, %v1305
        %v1322 = vpack.c.b16 %v1308, %v1307
        %v1323 = vpack.c.b16 %v1310, %v1309
        %v1324 = vpack.c.b16 %v1312, %v1311
        %v1325 = vpack.c.b16 %v1314, %v1313
        %v1326 = vpack.c.b16 %v1316, %v1315
        %v1327 = vpack.c.b16 %v1318, %v1317
        %v1328 = vpack.c.b16 %v1320, %v1319
        %1337 = vmatprep.subr.bf16.mxu0 0
        %1338 = vmatpush1.bf16.msra.mxu0 %v1321
        %1339 = vmatprep.subr.bf16.mxu0 0
        %1340 = vmatpush1.bf16.msra.mxu0 %v1322
        %1341 = vmatprep.subr.bf16.mxu0 0
        %1342 = vmatpush1.bf16.msra.mxu0 %v1323
        %1343 = vmatprep.subr.bf16.mxu0 0
        %1344 = vmatpush1.bf16.msra.mxu0 %v1324
        %1345 = vmatprep.subr.bf16.mxu0 0
        %1346 = vmatpush1.bf16.msra.mxu0 %v1325
        %1347 = vmatprep.subr.bf16.mxu0 0
        %1348 = vmatpush1.bf16.msra.mxu0 %v1326
        %1349 = vmatprep.subr.bf16.mxu0 0
        %1350 = vmatpush1.bf16.msra.mxu0 %v1327
        %1351 = vmatprep.subr.bf16.mxu0 0
        %1352 = vmatpush1.bf16.msra.mxu0 %v1328
        %1353 = vmatprep.subr.bf16.mxu0 0
        %1354 = vmatpush1.bf16.msra.mxu0 0
        %1355 = vmatprep.subr.bf16.mxu0 0
        %1356 = vmatpush1.bf16.msra.mxu0 0
        %1357 = vmatprep.subr.bf16.mxu0 0
        %1358 = vmatpush1.bf16.msra.mxu0 0
        %1359 = vmatprep.subr.bf16.mxu0 0
        %1360 = vmatpush1.bf16.msra.mxu0 0
        %1361 = vmatprep.subr.bf16.mxu0 0
        %1362 = vmatpush1.bf16.msra.mxu0 0
        %1363 = vmatprep.subr.bf16.mxu0 0
        %1364 = vmatpush1.bf16.msra.mxu0 0
        %1365 = vmatprep.subr.bf16.mxu0 0
        %1366 = vmatpush1.bf16.msra.mxu0 0
        %1367 = vmatprep.subr.bf16.mxu0 0
        %1368 = vmatpush1.bf16.msra.mxu0 0
        %1369 = vmatprep.mubr.bf16.mxu0 0
        %1370 = vmatmul.mubr.bf16.gmra.mrb[0].mxu0 %v1272
        %v1371 = vpop.f32.mrb[0].mxu0
        %v1372 = vadd.f32 0.0, %v1371
        %v1373 = vpop.f32.mrb[0].mxu0
        %v1374 = vpop.f32.mrb[0].mxu0
        %v1375 = vpop.f32.mrb[0].mxu0
        %1376 = vdwg.mxu0
        %v1393 = vunpack.c.l.b16 %v1151
        %v1394 = vunpack.c.l.b16 %v1152
        %v1395 = vunpack.c.l.b16 %v1153
        %v1396 = vunpack.c.l.b16 %v1154
        %v1397 = vunpack.c.l.b16 %v1155
        %v1398 = vunpack.c.l.b16 %v1156
        %v1399 = vunpack.c.l.b16 %v1157
        %v1400 = vunpack.c.l.b16 %v1158
        %v1401 = vunpack.c.l.b16 %v1159
        %v1402 = vunpack.c.l.b16 %v1160
        %v1403 = vunpack.c.l.b16 %v1161
        %v1404 = vunpack.c.l.b16 %v1162
        %v1405 = vunpack.c.l.b16 %v1163
        %v1406 = vunpack.c.l.b16 %v1164
        %v1407 = vunpack.c.l.b16 %v1165
        %v1408 = vunpack.c.l.b16 %v1166
        %v1409 = vpack.c.b16 %v1394, %v1393
        %v1410 = vpack.c.b16 %v1396, %v1395
        %v1411 = vpack.c.b16 %v1398, %v1397
        %v1412 = vpack.c.b16 %v1400, %v1399
        %v1413 = vpack.c.b16 %v1402, %v1401
        %v1414 = vpack.c.b16 %v1404, %v1403
        %v1415 = vpack.c.b16 %v1406, %v1405
        %v1416 = vpack.c.b16 %v1408, %v1407
        %1425 = vmatprep.subr.bf16.mxu0 0
        %1426 = vmatpush1.bf16.msra.mxu0 %v1409
        %1427 = vmatprep.subr.bf16.mxu0 0
        %1428 = vmatpush1.bf16.msra.mxu0 %v1410
        %1429 = vmatprep.subr.bf16.mxu0 0
        %1430 = vmatpush1.bf16.msra.mxu0 %v1411
        %1431 = vmatprep.subr.bf16.mxu0 0
        %1432 = vmatpush1.bf16.msra.mxu0 %v1412
        %1433 = vmatprep.subr.bf16.mxu0 0
        %1434 = vmatpush1.bf16.msra.mxu0 %v1413
        %1435 = vmatprep.subr.bf16.mxu0 0
        %1436 = vmatpush1.bf16.msra.mxu0 %v1414
        %1437 = vmatprep.subr.bf16.mxu0 0
        %1438 = vmatpush1.bf16.msra.mxu0 %v1415
        %1439 = vmatprep.subr.bf16.mxu0 0
        %1440 = vmatpush1.bf16.msra.mxu0 %v1416
        %1441 = vmatprep.subr.bf16.mxu0 0
        %1442 = vmatpush1.bf16.msra.mxu0 0
        %1443 = vmatprep.subr.bf16.mxu0 0
        %1444 = vmatpush1.bf16.msra.mxu0 0
        %1445 = vmatprep.subr.bf16.mxu0 0
        %1446 = vmatpush1.bf16.msra.mxu0 0
        %1447 = vmatprep.subr.bf16.mxu0 0
        %1448 = vmatpush1.bf16.msra.mxu0 0
        %1449 = vmatprep.subr.bf16.mxu0 0
        %1450 = vmatpush1.bf16.msra.mxu0 0
        %1451 = vmatprep.subr.bf16.mxu0 0
        %1452 = vmatpush1.bf16.msra.mxu0 0
        %1453 = vmatprep.subr.bf16.mxu0 0
        %1454 = vmatpush1.bf16.msra.mxu0 0
        %1455 = vmatprep.subr.bf16.mxu0 0
        %1456 = vmatpush1.bf16.msra.mxu0 0
        %1457 = vmatprep.mubr.bf16.mxu0 0
        %1458 = vmatmul.mubr.bf16.gmra.mrb[0].mxu0 %v1150
        %v1459 = vpop.f32.mrb[0].mxu0
        %v1460 = vadd.f32 %v1372, %v1459
        %v1461 = vpop.f32.mrb[0].mxu0
        %v1462 = vpop.f32.mrb[0].mxu0
        %v1463 = vpop.f32.mrb[0].mxu0
        %1464 = vdwg.mxu0
        %v1465 = vpack.c.bf16 %v788, %v788
        %v1466 = vpack.c.bf16 %v872, %v872
        %v1467 = vpack.c.bf16 %v993, %v993
        %1468 = vmatprep.subr.bf16.mxu0 0
        %1469 = vmatpush1.bf16.xpose.msra.mxu0 %v1466
        %1470 = vmatprep.subr.bf16.mxu0 0
        %1471 = vmatpush1.bf16.xpose.msra.mxu0 0
        %1472 = vmatprep.subr.bf16.mxu0 0
        %1473 = vmatpush1.bf16.xpose.msra.mxu0 0
        %1474 = vmatprep.subr.bf16.mxu0 0
        %1475 = vmatpush1.bf16.xpose.msra.mxu0 0
        %1476 = vmatprep.subr.bf16.mxu0 0
        %1477 = vmatpush1.bf16.xpose.msra.mxu0 0
        %1478 = vmatprep.subr.bf16.mxu0 0
        %1479 = vmatpush1.bf16.xpose.msra.mxu0 0
        %1480 = vmatprep.subr.bf16.mxu0 0
        %1481 = vmatpush1.bf16.xpose.msra.mxu0 0
        %1482 = vmatprep.subr.bf16.mxu0 0
        %1483 = vmatpush1.bf16.xpose.msra.mxu0 0
        %1484 = vmatprep.subr.bf16.mxu0 0
        %1485 = vmatpush1.bf16.xpose.msra.mxu0 0
        %1486 = vmatprep.subr.bf16.mxu0 0
        %1487 = vmatpush1.bf16.xpose.msra.mxu0 0
        %1488 = vmatprep.subr.bf16.mxu0 0
        %1489 = vmatpush1.bf16.xpose.msra.mxu0 0
        %1490 = vmatprep.subr.bf16.mxu0 0
        %1491 = vmatpush1.bf16.xpose.msra.mxu0 0
        %1492 = vmatprep.subr.bf16.mxu0 0
        %1493 = vmatpush1.bf16.xpose.msra.mxu0 0
        %1494 = vmatprep.subr.bf16.mxu0 0
        %1495 = vmatpush1.bf16.xpose.msra.mxu0 0
        %1496 = vmatprep.subr.bf16.mxu0 0
        %1497 = vmatpush1.bf16.xpose.msra.mxu0 0
        %1498 = vmatprep.subr.bf16.mxu0 0
        %1499 = vmatpush1.bf16.xpose.msra.mxu0 0
        %1500 = vmatprep.mubr.bf16.mxu0 0
        %1501 = vmatmul.mubr.bf16.gmra.mrb[0].mxu0 %v1465
        %v1502 = vpop.f32.mrb[0].mxu0
        %v1503 = vadd.f32 0.0, %v1502
        %v1504 = vpop.f32.mrb[0].mxu0
        %v1505 = vpop.f32.mrb[0].mxu0
        %v1506 = vpop.f32.mrb[0].mxu0
        %1507 = vdwg.mxu0
        %v1508 = vmul.f32 %v1503, 0.35355338
        %v1509 = vsel %vm1088, %v1508, -1e+09
        %v1510 = vsel %vm1090, %v1509, -inf
        %1511 = vmax.xlane.f32.xlu0 %v1510
        %v1512 = vpop.xlane.xlu0 %1511
        %v1513 = vsub.f32 %v1509, %v1512
        %v1514 = vmul.f32 %v1513, 1.442695
        %v1515 = vpow.pop %v1514
        %v1516 = vsel %vm1090, %v1515, 0.0
        %1517 = vadd.xlane.f32.xlu0 %v1516
        %v1518 = vpop.xlane.xlu0 %1517
        %v1519 = vrcp.pop %v1518
        %v1520 = vmul.f32 %v1515, %v1519
        %s1521 = scalar_lea.vmem %s314, 16 [#allocation6]
        %1522 = vst.msk [vmem:[%s1521] sm:$0xff] %vm1090, %v1520
        %v1523 = vpack.c.bf16 %v1520, %v1520
        %v1525 = vsel %vm1090, %v1523, 0
        %v1528 = vsel %vm666, %v1467, 0
        %1530 = vmatprep.subr.bf16.mxu0 0
        %1531 = vmatpush1.bf16.msra.mxu0 %v1528
        %1532 = vmatprep.subr.bf16.mxu0 0
        %1533 = vmatpush1.bf16.msra.mxu0 0
        %1534 = vmatprep.subr.bf16.mxu0 0
        %1535 = vmatpush1.bf16.msra.mxu0 0
        %1536 = vmatprep.subr.bf16.mxu0 0
        %1537 = vmatpush1.bf16.msra.mxu0 0
        %1538 = vmatprep.subr.bf16.mxu0 0
        %1539 = vmatpush1.bf16.msra.mxu0 0
        %1540 = vmatprep.subr.bf16.mxu0 0
        %1541 = vmatpush1.bf16.msra.mxu0 0
        %1542 = vmatprep.subr.bf16.mxu0 0
        %1543 = vmatpush1.bf16.msra.mxu0 0
        %1544 = vmatprep.subr.bf16.mxu0 0
        %1545 = vmatpush1.bf16.msra.mxu0 0
        %1546 = vmatprep.subr.bf16.mxu0 0
        %1547 = vmatpush1.bf16.msra.mxu0 0
        %1548 = vmatprep.subr.bf16.mxu0 0
        %1549 = vmatpush1.bf16.msra.mxu0 0
        %1550 = vmatprep.subr.bf16.mxu0 0
        %1551 = vmatpush1.bf16.msra.mxu0 0
        %1552 = vmatprep.subr.bf16.mxu0 0
        %1553 = vmatpush1.bf16.msra.mxu0 0
        %1554 = vmatprep.subr.bf16.mxu0 0
        %1555 = vmatpush1.bf16.msra.mxu0 0
        %1556 = vmatprep.subr.bf16.mxu0 0
        %1557 = vmatpush1.bf16.msra.mxu0 0
        %1558 = vmatprep.subr.bf16.mxu0 0
        %1559 = vmatpush1.bf16.msra.mxu0 0
        %1560 = vmatprep.subr.bf16.mxu0 0
        %1561 = vmatpush1.bf16.msra.mxu0 0
        %1562 = vmatprep.mubr.bf16.mxu0 0
        %1563 = vmatmul.mubr.bf16.gmra.mrb[0].mxu0 %v1525
        %v1564 = vpop.f32.mrb[0].mxu0
        %v1565 = vadd.f32 0.0, %v1564
        %v1566 = vpop.f32.mrb[0].mxu0
        %v1567 = vpop.f32.mrb[0].mxu0
        %v1568 = vpop.f32.mrb[0].mxu0
        %1569 = vdwg.mxu0
        %v1570 = vpack.c.bf16 %v1565, %v1565
        %v1571 = vld [vmem:[%s6 + $0x80] sm:$0xf]
        %v1572 = vld [vmem:[%s6 + $0x84] sm:$0xf]
        %v1573 = vld [vmem:[%s6 + $0x88] sm:$0xf]
        %v1574 = vld [vmem:[%s6 + $0x8c] sm:$0xf]
        %v1575 = vld [vmem:[%s6 + $0x90] sm:$0xf]
        %v1576 = vld [vmem:[%s6 + $0x94] sm:$0xf]
        %v1577 = vld [vmem:[%s6 + $0x98] sm:$0xf]
        %v1578 = vld [vmem:[%s6 + $0x9c] sm:$0xf]
        %v1579 = vld [vmem:[%s6 + $0xa0] sm:$0xf]
        %v1580 = vld [vmem:[%s6 + $0xa4] sm:$0xf]
        %v1581 = vld [vmem:[%s6 + $0xa8] sm:$0xf]
        %v1582 = vld [vmem:[%s6 + $0xac] sm:$0xf]
        %v1583 = vld [vmem:[%s6 + $0xb0] sm:$0xf]
        %v1584 = vld [vmem:[%s6 + $0xb4] sm:$0xf]
        %v1585 = vld [vmem:[%s6 + $0xb8] sm:$0xf]
        %v1586 = vld [vmem:[%s6 + $0xbc] sm:$0xf]
        %v1603 = vunpack.c.l.b16 %v1571
        %v1604 = vunpack.c.l.b16 %v1572
        %v1605 = vunpack.c.l.b16 %v1573
        %v1606 = vunpack.c.l.b16 %v1574
        %v1607 = vunpack.c.l.b16 %v1575
        %v1608 = vunpack.c.l.b16 %v1576
        %v1609 = vunpack.c.l.b16 %v1577
        %v1610 = vunpack.c.l.b16 %v1578
        %v1611 = vunpack.c.l.b16 %v1579
        %v1612 = vunpack.c.l.b16 %v1580
        %v1613 = vunpack.c.l.b16 %v1581
        %v1614 = vunpack.c.l.b16 %v1582
        %v1615 = vunpack.c.l.b16 %v1583
        %v1616 = vunpack.c.l.b16 %v1584
        %v1617 = vunpack.c.l.b16 %v1585
        %v1618 = vunpack.c.l.b16 %v1586
        %v1619 = vpack.c.b16 %v1604, %v1603
        %v1620 = vpack.c.b16 %v1606, %v1605
        %v1621 = vpack.c.b16 %v1608, %v1607
        %v1622 = vpack.c.b16 %v1610, %v1609
        %v1623 = vpack.c.b16 %v1612, %v1611
        %v1624 = vpack.c.b16 %v1614, %v1613
        %v1625 = vpack.c.b16 %v1616, %v1615
        %v1626 = vpack.c.b16 %v1618, %v1617
        %1635 = vmatprep.subr.bf16.mxu0 0
        %1636 = vmatpush1.bf16.msra.mxu0 %v1619
        %1637 = vmatprep.subr.bf16.mxu0 0
        %1638 = vmatpush1.bf16.msra.mxu0 %v1620
        %1639 = vmatprep.subr.bf16.mxu0 0
        %1640 = vmatpush1.bf16.msra.mxu0 %v1621
        %1641 = vmatprep.subr.bf16.mxu0 0
        %1642 = vmatpush1.bf16.msra.mxu0 %v1622
        %1643 = vmatprep.subr.bf16.mxu0 0
        %1644 = vmatpush1.bf16.msra.mxu0 %v1623
        %1645 = vmatprep.subr.bf16.mxu0 0
        %1646 = vmatpush1.bf16.msra.mxu0 %v1624
        %1647 = vmatprep.subr.bf16.mxu0 0
        %1648 = vmatpush1.bf16.msra.mxu0 %v1625
        %1649 = vmatprep.subr.bf16.mxu0 0
        %1650 = vmatpush1.bf16.msra.mxu0 %v1626
        %1651 = vmatprep.subr.bf16.mxu0 0
        %1652 = vmatpush1.bf16.msra.mxu0 0
        %1653 = vmatprep.subr.bf16.mxu0 0
        %1654 = vmatpush1.bf16.msra.mxu0 0
        %1655 = vmatprep.subr.bf16.mxu0 0
        %1656 = vmatpush1.bf16.msra.mxu0 0
        %1657 = vmatprep.subr.bf16.mxu0 0
        %1658 = vmatpush1.bf16.msra.mxu0 0
        %1659 = vmatprep.subr.bf16.mxu0 0
        %1660 = vmatpush1.bf16.msra.mxu0 0
        %1661 = vmatprep.subr.bf16.mxu0 0
        %1662 = vmatpush1.bf16.msra.mxu0 0
        %1663 = vmatprep.subr.bf16.mxu0 0
        %1664 = vmatpush1.bf16.msra.mxu0 0
        %1665 = vmatprep.subr.bf16.mxu0 0
        %1666 = vmatpush1.bf16.msra.mxu0 0
        %1667 = vmatprep.mubr.bf16.mxu0 0
        %1668 = vmatmul.mubr.bf16.gmra.mrb[0].mxu0 %v1570
        %v1669 = vpop.f32.mrb[0].mxu0
        %v1670 = vadd.f32 0.0, %v1669
        %v1671 = vpop.f32.mrb[0].mxu0
        %v1672 = vpop.f32.mrb[0].mxu0
        %v1673 = vpop.f32.mrb[0].mxu0
        %1674 = vdwg.mxu0
        %v1675 = vadd.f32 %v1460, %v1670
        %v1676 = vpack.c.bf16 %v790, %v790
        %v1677 = vpack.c.bf16 %v911, %v911
        %v1678 = vpack.c.bf16 %v995, %v995
        %1679 = vmatprep.subr.bf16.mxu0 0
        %1680 = vmatpush1.bf16.xpose.msra.mxu0 %v1677
        %1681 = vmatprep.subr.bf16.mxu0 0
        %1682 = vmatpush1.bf16.xpose.msra.mxu0 0
        %1683 = vmatprep.subr.bf16.mxu0 0
        %1684 = vmatpush1.bf16.xpose.msra.mxu0 0
        %1685 = vmatprep.subr.bf16.mxu0 0
        %1686 = vmatpush1.bf16.xpose.msra.mxu0 0
        %1687 = vmatprep.subr.bf16.mxu0 0
        %1688 = vmatpush1.bf16.xpose.msra.mxu0 0
        %1689 = vmatprep.subr.bf16.mxu0 0
        %1690 = vmatpush1.bf16.xpose.msra.mxu0 0
        %1691 = vmatprep.subr.bf16.mxu0 0
        %1692 = vmatpush1.bf16.xpose.msra.mxu0 0
        %1693 = vmatprep.subr.bf16.mxu0 0
        %1694 = vmatpush1.bf16.xpose.msra.mxu0 0
        %1695 = vmatprep.subr.bf16.mxu0 0
        %1696 = vmatpush1.bf16.xpose.msra.mxu0 0
        %1697 = vmatprep.subr.bf16.mxu0 0
        %1698 = vmatpush1.bf16.xpose.msra.mxu0 0
        %1699 = vmatprep.subr.bf16.mxu0 0
        %1700 = vmatpush1.bf16.xpose.msra.mxu0 0
        %1701 = vmatprep.subr.bf16.mxu0 0
        %1702 = vmatpush1.bf16.xpose.msra.mxu0 0
        %1703 = vmatprep.subr.bf16.mxu0 0
        %1704 = vmatpush1.bf16.xpose.msra.mxu0 0
        %1705 = vmatprep.subr.bf16.mxu0 0
        %1706 = vmatpush1.bf16.xpose.msra.mxu0 0
        %1707 = vmatprep.subr.bf16.mxu0 0
        %1708 = vmatpush1.bf16.xpose.msra.mxu0 0
        %1709 = vmatprep.subr.bf16.mxu0 0
        %1710 = vmatpush1.bf16.xpose.msra.mxu0 0
        %1711 = vmatprep.mubr.bf16.mxu0 0
        %1712 = vmatmul.mubr.bf16.gmra.mrb[0].mxu0 %v1676
        %v1713 = vpop.f32.mrb[0].mxu0
        %v1714 = vadd.f32 0.0, %v1713
        %v1715 = vpop.f32.mrb[0].mxu0
        %v1716 = vpop.f32.mrb[0].mxu0
        %v1717 = vpop.f32.mrb[0].mxu0
        %1718 = vdwg.mxu0
        %v1719 = vmul.f32 %v1714, 0.35355338
        %v1720 = vsel %vm1088, %v1719, -1e+09
        %v1721 = vsel %vm1090, %v1720, -inf
        %1722 = vmax.xlane.f32.xlu0 %v1721
        %v1723 = vpop.xlane.xlu0 %1722
        %v1724 = vsub.f32 %v1720, %v1723
        %v1725 = vmul.f32 %v1724, 1.442695
        %v1726 = vpow.pop %v1725
        %v1727 = vsel %vm1090, %v1726, 0.0
        %1728 = vadd.xlane.f32.xlu0 %v1727
        %v1729 = vpop.xlane.xlu0 %1728
        %v1730 = vrcp.pop %v1729
        %v1731 = vmul.f32 %v1726, %v1730
        %s1732 = scalar_lea.vmem %s314, 24 [#allocation6]
        %1733 = vst.msk [vmem:[%s1732] sm:$0xff] %vm1090, %v1731
        %v1734 = vpack.c.bf16 %v1731, %v1731
        %v1736 = vsel %vm1090, %v1734, 0
        %v1739 = vsel %vm666, %v1678, 0
        %1741 = vmatprep.subr.bf16.mxu0 0
        %1742 = vmatpush1.bf16.msra.mxu0 %v1739
        %1743 = vmatprep.subr.bf16.mxu0 0
        %1744 = vmatpush1.bf16.msra.mxu0 0
        %1745 = vmatprep.subr.bf16.mxu0 0
        %1746 = vmatpush1.bf16.msra.mxu0 0
        %1747 = vmatprep.subr.bf16.mxu0 0
        %1748 = vmatpush1.bf16.msra.mxu0 0
        %1749 = vmatprep.subr.bf16.mxu0 0
        %1750 = vmatpush1.bf16.msra.mxu0 0
        %1751 = vmatprep.subr.bf16.mxu0 0
        %1752 = vmatpush1.bf16.msra.mxu0 0
        %1753 = vmatprep.subr.bf16.mxu0 0
        %1754 = vmatpush1.bf16.msra.mxu0 0
        %1755 = vmatprep.subr.bf16.mxu0 0
        %1756 = vmatpush1.bf16.msra.mxu0 0
        %1757 = vmatprep.subr.bf16.mxu0 0
        %1758 = vmatpush1.bf16.msra.mxu0 0
        %1759 = vmatprep.subr.bf16.mxu0 0
        %1760 = vmatpush1.bf16.msra.mxu0 0
        %1761 = vmatprep.subr.bf16.mxu0 0
        %1762 = vmatpush1.bf16.msra.mxu0 0
        %1763 = vmatprep.subr.bf16.mxu0 0
        %1764 = vmatpush1.bf16.msra.mxu0 0
        %1765 = vmatprep.subr.bf16.mxu0 0
        %1766 = vmatpush1.bf16.msra.mxu0 0
        %1767 = vmatprep.subr.bf16.mxu0 0
        %1768 = vmatpush1.bf16.msra.mxu0 0
        %1769 = vmatprep.subr.bf16.mxu0 0
        %1770 = vmatpush1.bf16.msra.mxu0 0
        %1771 = vmatprep.subr.bf16.mxu0 0
        %1772 = vmatpush1.bf16.msra.mxu0 0
        %1773 = vmatprep.mubr.bf16.mxu0 0
        %1774 = vmatmul.mubr.bf16.gmra.mrb[0].mxu0 %v1736
        %v1775 = vpop.f32.mrb[0].mxu0
        %v1776 = vadd.f32 0.0, %v1775
        %v1777 = vpop.f32.mrb[0].mxu0
        %v1778 = vpop.f32.mrb[0].mxu0
        %v1779 = vpop.f32.mrb[0].mxu0
        %1780 = vdwg.mxu0
        %v1781 = vpack.c.bf16 %v1776, %v1776
        %v1782 = vld [vmem:[%s6 + $0xc0] sm:$0xf]
        %v1783 = vld [vmem:[%s6 + $0xc4] sm:$0xf]
        %v1784 = vld [vmem:[%s6 + $0xc8] sm:$0xf]
        %v1785 = vld [vmem:[%s6 + $0xcc] sm:$0xf]
        %v1786 = vld [vmem:[%s6 + $0xd0] sm:$0xf]
        %v1787 = vld [vmem:[%s6 + $0xd4] sm:$0xf]
        %v1788 = vld [vmem:[%s6 + $0xd8] sm:$0xf]
        %v1789 = vld [vmem:[%s6 + $0xdc] sm:$0xf]
        %v1790 = vld [vmem:[%s6 + $0xe0] sm:$0xf]
        %v1791 = vld [vmem:[%s6 + $0xe4] sm:$0xf]
        %v1792 = vld [vmem:[%s6 + $0xe8] sm:$0xf]
        %v1793 = vld [vmem:[%s6 + $0xec] sm:$0xf]
        %v1794 = vld [vmem:[%s6 + $0xf0] sm:$0xf]
        %v1795 = vld [vmem:[%s6 + $0xf4] sm:$0xf]
        %v1796 = vld [vmem:[%s6 + $0xf8] sm:$0xf]
        %v1797 = vld [vmem:[%s6 + $0xfc] sm:$0xf]
        %v1814 = vunpack.c.l.b16 %v1782
        %v1815 = vunpack.c.l.b16 %v1783
        %v1816 = vunpack.c.l.b16 %v1784
        %v1817 = vunpack.c.l.b16 %v1785
        %v1818 = vunpack.c.l.b16 %v1786
        %v1819 = vunpack.c.l.b16 %v1787
        %v1820 = vunpack.c.l.b16 %v1788
        %v1821 = vunpack.c.l.b16 %v1789
        %v1822 = vunpack.c.l.b16 %v1790
        %v1823 = vunpack.c.l.b16 %v1791
        %v1824 = vunpack.c.l.b16 %v1792
        %v1825 = vunpack.c.l.b16 %v1793
        %v1826 = vunpack.c.l.b16 %v1794
        %v1827 = vunpack.c.l.b16 %v1795
        %v1828 = vunpack.c.l.b16 %v1796
        %v1829 = vunpack.c.l.b16 %v1797
        %v1830 = vpack.c.b16 %v1815, %v1814
        %v1831 = vpack.c.b16 %v1817, %v1816
        %v1832 = vpack.c.b16 %v1819, %v1818
        %v1833 = vpack.c.b16 %v1821, %v1820
        %v1834 = vpack.c.b16 %v1823, %v1822
        %v1835 = vpack.c.b16 %v1825, %v1824
        %v1836 = vpack.c.b16 %v1827, %v1826
        %v1837 = vpack.c.b16 %v1829, %v1828
        %1846 = vmatprep.subr.bf16.mxu0 0
        %1847 = vmatpush1.bf16.msra.mxu0 %v1830
        %1848 = vmatprep.subr.bf16.mxu0 0
        %1849 = vmatpush1.bf16.msra.mxu0 %v1831
        %1850 = vmatprep.subr.bf16.mxu0 0
        %1851 = vmatpush1.bf16.msra.mxu0 %v1832
        %1852 = vmatprep.subr.bf16.mxu0 0
        %1853 = vmatpush1.bf16.msra.mxu0 %v1833
        %1854 = vmatprep.subr.bf16.mxu0 0
        %1855 = vmatpush1.bf16.msra.mxu0 %v1834
        %1856 = vmatprep.subr.bf16.mxu0 0
        %1857 = vmatpush1.bf16.msra.mxu0 %v1835
        %1858 = vmatprep.subr.bf16.mxu0 0
        %1859 = vmatpush1.bf16.msra.mxu0 %v1836
        %1860 = vmatprep.subr.bf16.mxu0 0
        %1861 = vmatpush1.bf16.msra.mxu0 %v1837
        %1862 = vmatprep.subr.bf16.mxu0 0
        %1863 = vmatpush1.bf16.msra.mxu0 0
        %1864 = vmatprep.subr.bf16.mxu0 0
        %1865 = vmatpush1.bf16.msra.mxu0 0
        %1866 = vmatprep.subr.bf16.mxu0 0
        %1867 = vmatpush1.bf16.msra.mxu0 0
        %1868 = vmatprep.subr.bf16.mxu0 0
        %1869 = vmatpush1.bf16.msra.mxu0 0
        %1870 = vmatprep.subr.bf16.mxu0 0
        %1871 = vmatpush1.bf16.msra.mxu0 0
        %1872 = vmatprep.subr.bf16.mxu0 0
        %1873 = vmatpush1.bf16.msra.mxu0 0
        %1874 = vmatprep.subr.bf16.mxu0 0
        %1875 = vmatpush1.bf16.msra.mxu0 0
        %1876 = vmatprep.subr.bf16.mxu0 0
        %1877 = vmatpush1.bf16.msra.mxu0 0
        %1878 = vmatprep.mubr.bf16.mxu0 0
        %1879 = vmatmul.mubr.bf16.gmra.mrb[0].mxu0 %v1781
        %v1880 = vpop.f32.mrb[0].mxu0
        %v1881 = vadd.f32 0.0, %v1880
        %v1882 = vpop.f32.mrb[0].mxu0
        %v1883 = vpop.f32.mrb[0].mxu0
        %v1884 = vpop.f32.mrb[0].mxu0
        %1885 = vdwg.mxu0
        %v1886 = vadd.f32 %v1675, %v1881
        %v1887 = vpack.c.bf16 %v829, %v829
        %v1888 = vpack.c.bf16 %v913, %v913
        %v1889 = vpack.c.bf16 %v1034, %v1034
        %1890 = vmatprep.subr.bf16.mxu0 0
        %1891 = vmatpush1.bf16.xpose.msra.mxu0 %v1888
        %1892 = vmatprep.subr.bf16.mxu0 0
        %1893 = vmatpush1.bf16.xpose.msra.mxu0 0
        %1894 = vmatprep.subr.bf16.mxu0 0
        %1895 = vmatpush1.bf16.xpose.msra.mxu0 0
        %1896 = vmatprep.subr.bf16.mxu0 0
        %1897 = vmatpush1.bf16.xpose.msra.mxu0 0
        %1898 = vmatprep.subr.bf16.mxu0 0
        %1899 = vmatpush1.bf16.xpose.msra.mxu0 0
        %1900 = vmatprep.subr.bf16.mxu0 0
        %1901 = vmatpush1.bf16.xpose.msra.mxu0 0
        %1902 = vmatprep.subr.bf16.mxu0 0
        %1903 = vmatpush1.bf16.xpose.msra.mxu0 0
        %1904 = vmatprep.subr.bf16.mxu0 0
        %1905 = vmatpush1.bf16.xpose.msra.mxu0 0
        %1906 = vmatprep.subr.bf16.mxu0 0
        %1907 = vmatpush1.bf16.xpose.msra.mxu0 0
        %1908 = vmatprep.subr.bf16.mxu0 0
        %1909 = vmatpush1.bf16.xpose.msra.mxu0 0
        %1910 = vmatprep.subr.bf16.mxu0 0
        %1911 = vmatpush1.bf16.xpose.msra.mxu0 0
        %1912 = vmatprep.subr.bf16.mxu0 0
        %1913 = vmatpush1.bf16.xpose.msra.mxu0 0
        %1914 = vmatprep.subr.bf16.mxu0 0
        %1915 = vmatpush1.bf16.xpose.msra.mxu0 0
        %1916 = vmatprep.subr.bf16.mxu0 0
        %1917 = vmatpush1.bf16.xpose.msra.mxu0 0
        %1918 = vmatprep.subr.bf16.mxu0 0
        %1919 = vmatpush1.bf16.xpose.msra.mxu0 0
        %1920 = vmatprep.subr.bf16.mxu0 0
        %1921 = vmatpush1.bf16.xpose.msra.mxu0 0
        %1922 = vmatprep.mubr.bf16.mxu0 0
        %1923 = vmatmul.mubr.bf16.gmra.mrb[0].mxu0 %v1887
        %v1924 = vpop.f32.mrb[0].mxu0
        %v1925 = vadd.f32 0.0, %v1924
        %v1926 = vpop.f32.mrb[0].mxu0
        %v1927 = vpop.f32.mrb[0].mxu0
        %v1928 = vpop.f32.mrb[0].mxu0
        %1929 = vdwg.mxu0
        %v1930 = vmul.f32 %v1925, 0.35355338
        %v1931 = vsel %vm1088, %v1930, -1e+09
        %v1932 = vsel %vm1090, %v1931, -inf
        %1933 = vmax.xlane.f32.xlu0 %v1932
        %v1934 = vpop.xlane.xlu0 %1933
        %v1935 = vsub.f32 %v1931, %v1934
        %v1936 = vmul.f32 %v1935, 1.442695
        %v1937 = vpow.pop %v1936
        %v1938 = vsel %vm1090, %v1937, 0.0
        %1939 = vadd.xlane.f32.xlu0 %v1938
        %v1940 = vpop.xlane.xlu0 %1939
        %v1941 = vrcp.pop %v1940
        %v1942 = vmul.f32 %v1937, %v1941
        %s1943 = scalar_lea.vmem %s314, 32 [#allocation6]
        %1944 = vst.msk [vmem:[%s1943] sm:$0xff] %vm1090, %v1942
        %v1945 = vpack.c.bf16 %v1942, %v1942
        %v1947 = vsel %vm1090, %v1945, 0
        %v1950 = vsel %vm666, %v1889, 0
        %1952 = vmatprep.subr.bf16.mxu0 0
        %1953 = vmatpush1.bf16.msra.mxu0 %v1950
        %1954 = vmatprep.subr.bf16.mxu0 0
        %1955 = vmatpush1.bf16.msra.mxu0 0
        %1956 = vmatprep.subr.bf16.mxu0 0
        %1957 = vmatpush1.bf16.msra.mxu0 0
        %1958 = vmatprep.subr.bf16.mxu0 0
        %1959 = vmatpush1.bf16.msra.mxu0 0
        %1960 = vmatprep.subr.bf16.mxu0 0
        %1961 = vmatpush1.bf16.msra.mxu0 0
        %1962 = vmatprep.subr.bf16.mxu0 0
        %1963 = vmatpush1.bf16.msra.mxu0 0
        %1964 = vmatprep.subr.bf16.mxu0 0
        %1965 = vmatpush1.bf16.msra.mxu0 0
        %1966 = vmatprep.subr.bf16.mxu0 0
        %1967 = vmatpush1.bf16.msra.mxu0 0
        %1968 = vmatprep.subr.bf16.mxu0 0
        %1969 = vmatpush1.bf16.msra.mxu0 0
        %1970 = vmatprep.subr.bf16.mxu0 0
        %1971 = vmatpush1.bf16.msra.mxu0 0
        %1972 = vmatprep.subr.bf16.mxu0 0
        %1973 = vmatpush1.bf16.msra.mxu0 0
        %1974 = vmatprep.subr.bf16.mxu0 0
        %1975 = vmatpush1.bf16.msra.mxu0 0
        %1976 = vmatprep.subr.bf16.mxu0 0
        %1977 = vmatpush1.bf16.msra.mxu0 0
        %1978 = vmatprep.subr.bf16.mxu0 0
        %1979 = vmatpush1.bf16.msra.mxu0 0
        %1980 = vmatprep.subr.bf16.mxu0 0
        %1981 = vmatpush1.bf16.msra.mxu0 0
        %1982 = vmatprep.subr.bf16.mxu0 0
        %1983 = vmatpush1.bf16.msra.mxu0 0
        %1984 = vmatprep.mubr.bf16.mxu0 0
        %1985 = vmatmul.mubr.bf16.gmra.mrb[0].mxu0 %v1947
        %v1986 = vpop.f32.mrb[0].mxu0
        %v1987 = vadd.f32 0.0, %v1986
        %v1988 = vpop.f32.mrb[0].mxu0
        %v1989 = vpop.f32.mrb[0].mxu0
        %v1990 = vpop.f32.mrb[0].mxu0
        %1991 = vdwg.mxu0
        %v1992 = vpack.c.bf16 %v1987, %v1987
        %v1993 = vld [vmem:[%s6 + $0x100] sm:$0xf]
        %v1994 = vld [vmem:[%s6 + $0x104] sm:$0xf]
        %v1995 = vld [vmem:[%s6 + $0x108] sm:$0xf]
        %v1996 = vld [vmem:[%s6 + $0x10c] sm:$0xf]
        %v1997 = vld [vmem:[%s6 + $0x110] sm:$0xf]
        %v1998 = vld [vmem:[%s6 + $0x114] sm:$0xf]
        %v1999 = vld [vmem:[%s6 + $0x118] sm:$0xf]
        %v2000 = vld [vmem:[%s6 + $0x11c] sm:$0xf]
        %v2001 = vld [vmem:[%s6 + $0x120] sm:$0xf]
        %v2002 = vld [vmem:[%s6 + $0x124] sm:$0xf]
        %v2003 = vld [vmem:[%s6 + $0x128] sm:$0xf]
        %v2004 = vld [vmem:[%s6 + $0x12c] sm:$0xf]
        %v2005 = vld [vmem:[%s6 + $0x130] sm:$0xf]
        %v2006 = vld [vmem:[%s6 + $0x134] sm:$0xf]
        %v2007 = vld [vmem:[%s6 + $0x138] sm:$0xf]
        %v2008 = vld [vmem:[%s6 + $0x13c] sm:$0xf]
        %v2025 = vunpack.c.l.b16 %v1993
        %v2026 = vunpack.c.l.b16 %v1994
        %v2027 = vunpack.c.l.b16 %v1995
        %v2028 = vunpack.c.l.b16 %v1996
        %v2029 = vunpack.c.l.b16 %v1997
        %v2030 = vunpack.c.l.b16 %v1998
        %v2031 = vunpack.c.l.b16 %v1999
        %v2032 = vunpack.c.l.b16 %v2000
        %v2033 = vunpack.c.l.b16 %v2001
        %v2034 = vunpack.c.l.b16 %v2002
        %v2035 = vunpack.c.l.b16 %v2003
        %v2036 = vunpack.c.l.b16 %v2004
        %v2037 = vunpack.c.l.b16 %v2005
        %v2038 = vunpack.c.l.b16 %v2006
        %v2039 = vunpack.c.l.b16 %v2007
        %v2040 = vunpack.c.l.b16 %v2008
        %v2041 = vpack.c.b16 %v2026, %v2025
        %v2042 = vpack.c.b16 %v2028, %v2027
        %v2043 = vpack.c.b16 %v2030, %v2029
        %v2044 = vpack.c.b16 %v2032, %v2031
        %v2045 = vpack.c.b16 %v2034, %v2033
        %v2046 = vpack.c.b16 %v2036, %v2035
        %v2047 = vpack.c.b16 %v2038, %v2037
        %v2048 = vpack.c.b16 %v2040, %v2039
        %2057 = vmatprep.subr.bf16.mxu0 0
        %2058 = vmatpush1.bf16.msra.mxu0 %v2041
        %2059 = vmatprep.subr.bf16.mxu0 0
        %2060 = vmatpush1.bf16.msra.mxu0 %v2042
        %2061 = vmatprep.subr.bf16.mxu0 0
        %2062 = vmatpush1.bf16.msra.mxu0 %v2043
        %2063 = vmatprep.subr.bf16.mxu0 0
        %2064 = vmatpush1.bf16.msra.mxu0 %v2044
        %2065 = vmatprep.subr.bf16.mxu0 0
        %2066 = vmatpush1.bf16.msra.mxu0 %v2045
        %2067 = vmatprep.subr.bf16.mxu0 0
        %2068 = vmatpush1.bf16.msra.mxu0 %v2046
        %2069 = vmatprep.subr.bf16.mxu0 0
        %2070 = vmatpush1.bf16.msra.mxu0 %v2047
        %2071 = vmatprep.subr.bf16.mxu0 0
        %2072 = vmatpush1.bf16.msra.mxu0 %v2048
        %2073 = vmatprep.subr.bf16.mxu0 0
        %2074 = vmatpush1.bf16.msra.mxu0 0
        %2075 = vmatprep.subr.bf16.mxu0 0
        %2076 = vmatpush1.bf16.msra.mxu0 0
        %2077 = vmatprep.subr.bf16.mxu0 0
        %2078 = vmatpush1.bf16.msra.mxu0 0
        %2079 = vmatprep.subr.bf16.mxu0 0
        %2080 = vmatpush1.bf16.msra.mxu0 0
        %2081 = vmatprep.subr.bf16.mxu0 0
        %2082 = vmatpush1.bf16.msra.mxu0 0
        %2083 = vmatprep.subr.bf16.mxu0 0
        %2084 = vmatpush1.bf16.msra.mxu0 0
        %2085 = vmatprep.subr.bf16.mxu0 0
        %2086 = vmatpush1.bf16.msra.mxu0 0
        %2087 = vmatprep.subr.bf16.mxu0 0
        %2088 = vmatpush1.bf16.msra.mxu0 0
        %2089 = vmatprep.mubr.bf16.mxu0 0
        %2090 = vmatmul.mubr.bf16.gmra.mrb[0].mxu0 %v1992
        %v2091 = vpop.f32.mrb[0].mxu0
        %v2092 = vadd.f32 0.0, %v2091
        %v2093 = vpop.f32.mrb[0].mxu0
        %v2094 = vpop.f32.mrb[0].mxu0
        %v2095 = vpop.f32.mrb[0].mxu0
        %2096 = vdwg.mxu0
        %v2097 = vadd.f32 %v1886, %v2092
        %v2098 = vadd.f32 %v321, %v2097
        %v2099 = vld [vmem:[%s7] sm:$0x1]
        %v2101 = vlaneseq
        %v2102 = vshrl.u32 %v2101, 7
        %v2103 = vsub.s32 0, %v2102
        %v2104 = vrot.slane %v2099, %v2103
        %v2106 = vadd.f32 %v2098, %v2104
        %2107 = vst.msk [vmem:[%s307] sm:$0xff] %vm324, %v2106
        %s2108 = sand.u32 %s193, 1
        %s2109 = scalar_lea.sflag [#allocation5], %s2108
        %s2110 = sand.u32 %s193, 1
        %s2111 = smul.addr %s2110, 8
        %s2112 = scalar_lea.vmem [#allocation4], %s2111
        %s2113 = sand.u32 %s219, 1
        %s2114 = scalar_lea.sflag [#allocation7], %s2113
        %s2115 = sand.u32 %s219, 1
        %s2116 = smul.addr %s2115, 40
        %s2117 = scalar_lea.vmem [#allocation6], %s2116
        // Predicated region
        $region49: #{tpu_custom_call.1} parent=47 // pred_check
          %p2118 = pneg %p203
        $region50: #{tpu_custom_call.1} parent=47 // pred_check_branch
          %2120 = sbr.rel (%p2118) target = $region52
        $region51: #{tpu_custom_call.1} parent=47 // pred_region
          %s2122 = ssub.s32 128, 128
          %2123 = vsyncadd %s2109, %s2122
          %s2124 = smul.addr %s33, 128
          %s2125 = scalar_lea.hbm %s8, %s2124
          %s2127 = sshll.u32 %s2112, 4
          %s2128 = int_to_ptr.vmem [resolvable:$true] %s2127
          %2130 = dma.vmem_to_hbm [thread:$0]  %s2128, 128, %s2125, %s2109
        $region52: #{tpu_custom_call.1} parent=47 // pred_fallthru
          _
        // Predicated region
        $region53: #{tpu_custom_call.1} parent=47 // pred_check
          %p2131 = pneg %p229
        $region54: #{tpu_custom_call.1} parent=47 // pred_check_branch
          %2133 = sbr.rel (%p2131) target = $region56
        $region55: #{tpu_custom_call.1} parent=47 // pred_region
          %s2135 = ssub.s32 640, 640
          %2136 = vsyncadd %s2114, %s2135
          %s2137 = smul.addr %s33, 5
          %s2138 = smul.addr %s2137, 128
          %s2139 = scalar_lea.hbm %s9, %s2138
          %s2140 = sshll.u32 %s2117, 4
          %s2141 = int_to_ptr.vmem [resolvable:$true] %s2140
          %2146 = dma.vmem_to_hbm [thread:$0]  %s2141, 640, %s2139, %s2114, 128, 128, 8
        $region56: #{tpu_custom_call.1} parent=47 // pred_fallthru
          _
      $region48: #{tpu_custom_call.1} parent=5 // pred_fallthru
        _
      %p2147 = scmp.le.s32.totalorder 2, %s28
      // Predicated region
      $region57: #{tpu_custom_call.1} parent=5 // pred_check
        %p2148 = pneg %p2147
      $region58: #{tpu_custom_call.1} parent=5 // pred_check_branch
        %2150 = sbr.rel (%p2148) target = $region60
      $region59: #{tpu_custom_call.1} parent=5 // pred_region
        %s2151 = ssub.s32 %s28, 2
        // Predicated region
        $region61: #{tpu_custom_call.1} parent=59 // pred_check
          %p2152 = pneg %p209
        $region62: #{tpu_custom_call.1} parent=59 // pred_check_branch
          %2154 = sbr.rel (%p2152) target = $region64
        $region63: #{tpu_custom_call.1} parent=59 // pred_region
          %s2155 = sand.u32 %s194, 1
          %s2156 = scalar_lea.sflag [#allocation5], %s2155
          %s2157 = sand.u32 %s194, 1
          %s2158 = smul.addr %s2157, 8
          %s2159 = scalar_lea.vmem [#allocation4], %s2158
          %2160 = dma.done %s2156, 128
        $region64: #{tpu_custom_call.1} parent=59 // pred_fallthru
          _
        // Predicated region
        $region65: #{tpu_custom_call.1} parent=59 // pred_check
          %p2161 = pneg %p235
        $region66: #{tpu_custom_call.1} parent=59 // pred_check_branch
          %2163 = sbr.rel (%p2161) target = $region68
        $region67: #{tpu_custom_call.1} parent=59 // pred_region
          %s2164 = sand.u32 %s220, 1
          %s2165 = scalar_lea.sflag [#allocation7], %s2164
          %s2166 = sand.u32 %s220, 1
          %s2167 = smul.addr %s2166, 40
          %s2168 = scalar_lea.vmem [#allocation6], %s2167
          %2169 = dma.done %s2165, 640
        $region68: #{tpu_custom_call.1} parent=59 // pred_fallthru
          _
      $region60: #{tpu_custom_call.1} parent=5 // pred_fallthru
        _
    $region6: #{tpu_custom_call.1} parent=1 // loop_footer
      %s32 = sadd.s32 1, %s28
    $region7: #{tpu_custom_call.1} parent=1 // loop_footer_branch
      %27 = sbr.rel target = $region3
    $region8: #{tpu_custom_call.1} parent=1 // loop_exit
      _
    %2170 = vsyncpa [#allocation5], 1
    %s2171 = scalar_lea.sflag [#allocation5], 1
    %2172 = vsyncpa %s2171, 1
    %2173 = vsyncpa [#allocation7], 1
    %s2174 = scalar_lea.sflag [#allocation7], 1
    %2175 = vsyncpa %s2174, 1

</llo_original>
